<compile_context>
chip_gen: v7x
topology: tpu7x:2x2x1
jax: 0.10.0
libtpu: 0.0.40
codegen_flags: <defaults>
</compile_context>

<pallas_src>
import jax
import jax.numpy as jnp
from jax.experimental import pallas as pl
from jax.experimental.pallas import tpu as pltpu


def _sigmoid(v):
    # exp -> EUP, approx reciprocal -> EUP slot; avoids the VALU long-latency
    # f32 divide.  Accuracy ~1e-4 relative, far inside the bf16 noise floor.
    return pl.reciprocal(1.0 + jnp.exp(-v), approx=True)


def gcn_kernel(a_ref, x_ref, w1_ref, b1_ref, w2_ref, b2_ref, mask_ref, out_ref):
    a = a_ref[...]                                       # [BN, BN] bf16, block-diag A_hat

    # ---- layer 1: sigmoid(A @ (X @ W1) + b1), batch folded into rows -------
    xw = jnp.dot(x_ref[...].astype(jnp.bfloat16), w1_ref[...],
                 preferred_element_type=jnp.float32)     # [BN, H]
    h = jnp.dot(a, xw.astype(jnp.bfloat16),
                preferred_element_type=jnp.float32)      # [BN, H]
    h = _sigmoid(h + b1_ref[...])                        # f32 epilogue

    # ---- dropout (training=True): pre-scaled {0, 1/keep} bf16 mask ---------
    h = h * mask_ref[...].astype(jnp.float32)

    # ---- layer 2: sigmoid(A @ (H @ W2) + b2) -------------------------------
    hw = jnp.dot(h.astype(jnp.bfloat16), w2_ref[...],
                 preferred_element_type=jnp.float32)     # [BN, 128] (padded head)
    y = jnp.dot(a, hw.astype(jnp.bfloat16),
                preferred_element_type=jnp.float32)      # [BN, 128]

    # Store only the real latent columns - no padded writeback to HBM.
    n_latent = out_ref.shape[-1]
    out_ref[...] = _sigmoid(y[:, :n_latent] + b2_ref[...])


def prepare_gcn(a_hat, params, batch):
    """One-time (per-module) prep: cached bf16 casts, lane-padded output head,
    and the batch-folded block-diagonal adjacency I_B (x) A_hat."""
    n_hid, n_latent = params["w2"].shape
    lane_pad = ((n_latent + 127) // 128) * 128
    w2p = (jnp.zeros((n_hid, lane_pad), jnp.float32)
           .at[:, :n_latent].set(params["w2"]).astype(jnp.bfloat16))
    a_big = jnp.kron(jnp.eye(batch, dtype=jnp.float32), a_hat).astype(jnp.bfloat16)
    return {
        "a_big": a_big,                                  # [B*N, B*N] bf16
        "w1": params["w1"].astype(jnp.bfloat16),         # [F, H]     bf16
        "b1": params["b1"],                              # [1, H]     f32
        "w2p": w2p,                                      # [H, 128]   bf16 (zero-padded)
        "b2": params["b2"],                              # [1, L]     f32
        "n_latent": n_latent,
        "batch": batch,
    }


def gcn_forward(prep, x, dropout_mask):
    """x: [B, N, F] f32; dropout_mask: [B, N, H] bf16 (pre-scaled {0, 1/keep}).
    Returns [B, N, n_latent] f32."""
    B, N, F = x.shape
    n_hid = prep["w1"].shape[1]
    n_latent = prep["n_latent"]
    BN = B * N

    x_flat = x.reshape(BN, F)                            # free reshape (row-flat)
    mask_flat = dropout_mask.reshape(BN, n_hid)

    vmem_spec = pl.BlockSpec(memory_space=pltpu.MemorySpace.VMEM)
    out = pl.pallas_call(
        gcn_kernel,
        out_shape=jax.ShapeDtypeStruct((BN, n_latent), jnp.float32),
        in_specs=[vmem_spec] * 7,
        out_specs=vmem_spec,
        compiler_params=pltpu.CompilerParams(
            vmem_limit_bytes=32 * 1024 * 1024),          # explicit, < v7x 64 MiB physical
    )(prep["a_big"], x_flat, prep["w1"], prep["b1"],
      prep["w2p"], prep["b2"], mask_flat)

    return out.reshape(B, N, n_latent)                   # free reshape


def build_normalized_adjacency(edge_index, num_nodes):
    """A_hat = D^{-1/2} (A + I) D^{-1/2}, dense, float32."""
    src, dst = edge_index[0], edge_index[1]
    a = jnp.zeros((num_nodes, num_nodes), jnp.float32)
    a = a.at[dst, src].set(1.0)
    a = a.at[src, dst].set(1.0)                          # treat graph as undirected
    a = jnp.maximum(a, jnp.eye(num_nodes, dtype=jnp.float32))   # self loops
    deg = jnp.sum(a, axis=1)
    d_inv_sqrt = jnp.where(deg > 0, 1.0 / jnp.sqrt(deg), 0.0)
    return a * d_inv_sqrt[:, None] * d_inv_sqrt[None, :]


if __name__ == "__main__":
    # Small shapes consistent with the module (lane-friendly where possible).
    BATCH, N_NODES, N_FEAT, N_HID, N_LATENT = 4, 64, 128, 128, 16
    DROPOUT_P = 0.5

    key = jax.random.PRNGKey(0)
    k_x, k_edge, k_w1, k_b1, k_w2, k_b2, k_mask = jax.random.split(key, 7)

    # Node features (batched forward calls) and a fixed random edge_index.
    x = jax.random.normal(k_x, (BATCH, N_NODES, N_FEAT), jnp.float32)
    edge_index = jax.random.randint(k_edge, (2, 256), 0, N_NODES)
    a_hat = build_normalized_adjacency(edge_index, N_NODES)

    glorot = lambda k, fi, fo: (jax.random.uniform(k, (fi, fo), jnp.float32,
                                                   -1.0, 1.0)
                                * jnp.sqrt(6.0 / (fi + fo)))
    params = {
        "w1": glorot(k_w1, N_FEAT, N_HID),
        "b1": 0.1 * jax.random.normal(k_b1, (1, N_HID), jnp.float32),
        "w2": glorot(k_w2, N_HID, N_LATENT),
        "b2": 0.1 * jax.random.normal(k_b2, (1, N_LATENT), jnp.float32),
    }

    # Dropout mask (training=True semantics): Bernoulli(keep)/keep, pre-scaled
    # and shipped as bf16 ({0, 2.0} are exact in bf16).
    keep = 1.0 - DROPOUT_P
    dropout_mask = ((jax.random.bernoulli(k_mask, keep, (BATCH, N_NODES, N_HID))
                     .astype(jnp.float32) / keep).astype(jnp.bfloat16))

    prep = prepare_gcn(a_hat, params, BATCH)             # one-time cached operands
    out = gcn_forward(prep, x, dropout_mask)
    out = jax.block_until_ready(out)

    # Pure-JAX reference with the same mixed precision as the kernel.
    # (Intentional precision loss vs. a true f32 PyTorch GCN: intermediates are
    # re-rounded to bf16 before each MXU matmul, hence the 1e-2 tolerance.)
    a_b = a_hat.astype(jnp.bfloat16)
    w1_b = params["w1"].astype(jnp.bfloat16)
    w2_b = params["w2"].astype(jnp.bfloat16)

    def ref_one(xg, mg):
        xw = jnp.dot(xg.astype(jnp.bfloat16), w1_b,
                     preferred_element_type=jnp.float32)
        h = jnp.dot(a_b, xw.astype(jnp.bfloat16),
                    preferred_element_type=jnp.float32)
        h = jax.nn.sigmoid(h + params["b1"]) * mg.astype(jnp.float32)
        hw = jnp.dot(h.astype(jnp.bfloat16), w2_b,
                     preferred_element_type=jnp.float32)
        y = jnp.dot(a_b, hw.astype(jnp.bfloat16),
                    preferred_element_type=jnp.float32)
        return jax.nn.sigmoid(y + params["b2"])

    ref = jax.vmap(ref_one)(x, dropout_mask)

    assert out.shape == (BATCH, N_NODES, N_LATENT)
    assert jnp.allclose(out, ref, atol=1e-2, rtol=1e-2), \
        float(jnp.max(jnp.abs(out - ref)))

    print("KERNEL_OK")
</pallas_src>

<mosaic_0001>
module attributes {stable_mosaic.version = 11 : i64} {
  func.func @gcn_kernel(%arg0: memref<256x256xbf16, #tpu.memory_space<vmem>>, %arg1: memref<256x128xf32, #tpu.memory_space<vmem>>, %arg2: memref<128x128xbf16, #tpu.memory_space<vmem>>, %arg3: memref<1x128xf32, #tpu.memory_space<vmem>>, %arg4: memref<128x128xbf16, #tpu.memory_space<vmem>>, %arg5: memref<1x16xf32, #tpu.memory_space<vmem>>, %arg6: memref<256x128xbf16, #tpu.memory_space<vmem>>, %arg7: memref<256x16xf32, #tpu.memory_space<vmem>>) attributes {dimension_semantics = [], scalar_prefetch = 0 : i64, scratch_operands = 0 : i64, tpu.core_type = #tpu.core_type<tc>} {
    %c0 = arith.constant 0 : index
    %c0_0 = arith.constant 0 : index
    %0 = vector.load %arg0[%c0, %c0_0] : memref<256x256xbf16, #tpu.memory_space<vmem>>, vector<256x256xbf16>
    %c0_1 = arith.constant 0 : index
    %c0_2 = arith.constant 0 : index
    %1 = vector.load %arg1[%c0_1, %c0_2] : memref<256x128xf32, #tpu.memory_space<vmem>>, vector<256x128xf32>
    %2 = arith.truncf %1 : vector<256x128xf32> to vector<256x128xbf16>
    %c0_3 = arith.constant 0 : index
    %c0_4 = arith.constant 0 : index
    %3 = vector.load %arg2[%c0_3, %c0_4] : memref<128x128xbf16, #tpu.memory_space<vmem>>, vector<128x128xbf16>
    %cst = arith.constant dense<0.000000e+00> : vector<256x128xf32>
    %4 = tpu.matmul %2, %3, %cst {dimension_numbers = #tpu.dot_dimension_numbers<[1], [0], [0], [1], [0, 0, 1, 1], [], []>} : vector<256x128xbf16>, vector<128x128xbf16>, vector<256x128xf32> -> vector<256x128xf32>
    %5 = arith.truncf %4 : vector<256x128xf32> to vector<256x128xbf16>
    %cst_5 = arith.constant dense<0.000000e+00> : vector<256x128xf32>
    %6 = tpu.matmul %0, %5, %cst_5 {dimension_numbers = #tpu.dot_dimension_numbers<[1], [0], [0], [1], [0, 0, 1, 1], [], []>} : vector<256x256xbf16>, vector<256x128xbf16>, vector<256x128xf32> -> vector<256x128xf32>
    %c0_6 = arith.constant 0 : index
    %c0_7 = arith.constant 0 : index
    %7 = vector.load %arg3[%c0_6, %c0_7] : memref<1x128xf32, #tpu.memory_space<vmem>>, vector<1x128xf32>
    %8 = vector.broadcast %7 : vector<1x128xf32> to vector<256x128xf32>
    %9 = arith.addf %6, %8 : vector<256x128xf32>
    %cst_8 = arith.constant 0.000000e+00 : f32
    %10 = vector.broadcast %cst_8 : f32 to vector<256x128xf32>
    %11 = arith.subf %10, %9 : vector<256x128xf32>
    %12 = math.exp %11 : vector<256x128xf32>
    %cst_9 = arith.constant 1.000000e+00 : f32
    %13 = vector.broadcast %cst_9 : f32 to vector<256x128xf32>
    %14 = arith.addf %13, %12 : vector<256x128xf32>
    %15 = tpu.reciprocal %14 {approx = true} : vector<256x128xf32> -> vector<256x128xf32>
    %c0_10 = arith.constant 0 : index
    %c0_11 = arith.constant 0 : index
    %16 = vector.load %arg6[%c0_10, %c0_11] : memref<256x128xbf16, #tpu.memory_space<vmem>>, vector<256x128xbf16>
    %17 = arith.extf %16 : vector<256x128xbf16> to vector<256x128xf32>
    %18 = arith.mulf %15, %17 : vector<256x128xf32>
    %19 = arith.truncf %18 : vector<256x128xf32> to vector<256x128xbf16>
    %c0_12 = arith.constant 0 : index
    %c0_13 = arith.constant 0 : index
    %20 = vector.load %arg4[%c0_12, %c0_13] : memref<128x128xbf16, #tpu.memory_space<vmem>>, vector<128x128xbf16>
    %cst_14 = arith.constant dense<0.000000e+00> : vector<256x128xf32>
    %21 = tpu.matmul %19, %20, %cst_14 {dimension_numbers = #tpu.dot_dimension_numbers<[1], [0], [0], [1], [0, 0, 1, 1], [], []>} : vector<256x128xbf16>, vector<128x128xbf16>, vector<256x128xf32> -> vector<256x128xf32>
    %22 = arith.truncf %21 : vector<256x128xf32> to vector<256x128xbf16>
    %cst_15 = arith.constant dense<0.000000e+00> : vector<256x128xf32>
    %23 = tpu.matmul %0, %22, %cst_15 {dimension_numbers = #tpu.dot_dimension_numbers<[1], [0], [0], [1], [0, 0, 1, 1], [], []>} : vector<256x256xbf16>, vector<256x128xbf16>, vector<256x128xf32> -> vector<256x128xf32>
    %24 = vector.extract_strided_slice %23 {offsets = [0, 0], sizes = [256, 16], strides = [1, 1]} : vector<256x128xf32> to vector<256x16xf32>
    %c0_16 = arith.constant 0 : index
    %c0_17 = arith.constant 0 : index
    %25 = vector.load %arg5[%c0_16, %c0_17] : memref<1x16xf32, #tpu.memory_space<vmem>>, vector<1x16xf32>
    %26 = vector.broadcast %25 : vector<1x16xf32> to vector<256x16xf32>
    %27 = arith.addf %24, %26 : vector<256x16xf32>
    %cst_18 = arith.constant 0.000000e+00 : f32
    %28 = vector.broadcast %cst_18 : f32 to vector<256x16xf32>
    %29 = arith.subf %28, %27 : vector<256x16xf32>
    %30 = math.exp %29 : vector<256x16xf32>
    %cst_19 = arith.constant 1.000000e+00 : f32
    %31 = vector.broadcast %cst_19 : f32 to vector<256x16xf32>
    %32 = arith.addf %31, %30 : vector<256x16xf32>
    %33 = tpu.reciprocal %32 {approx = true} : vector<256x16xf32> -> vector<256x16xf32>
    %c0_20 = arith.constant 0 : index
    %c0_21 = arith.constant 0 : index
    %34 = vector.load %arg7[%c0_20, %c0_21] : memref<256x16xf32, #tpu.memory_space<vmem>>, vector<256x16xf32>
    tpu.vector_store %arg7[%c0_20, %c0_21], %33 {strides = array<i32>} : memref<256x16xf32, #tpu.memory_space<vmem>>, vector<256x16xf32>,
    return
  }
}

</mosaic_0001>

<llo_original>
// kernel: tpu_custom_call.1
$region0: #{tpu_custom_call.1}
  #allocation0 [shape = 'u32[]', space=smem, size = 0x4, offset = 0x4, fixed_abs, tag = 'smem constant byte address 0x4 - core index']
  #allocation1 [shape = 'u32[144,128]{1,0:T(1,128)}', space=vmem, size = 0x12000, scoped, tag = 'internal scratch']
  %s0 = inlined_call_operand.hbm [shape: bf16[256,256], index: 0, kind: input, shape index: {}]
  %s1 = inlined_call_operand.hbm [shape: f32[256,128], index: 1, kind: input, shape index: {}]
  %s2 = inlined_call_operand.hbm [shape: bf16[128,128], index: 2, kind: input, shape index: {}]
  %s3 = inlined_call_operand.vmem [shape: f32[1,128], index: 3, kind: input, shape index: {}]
  %s4 = inlined_call_operand.hbm [shape: bf16[128,128], index: 4, kind: input, shape index: {}]
  %s5 = inlined_call_operand.vmem [shape: f32[1,16], index: 5, kind: input, shape index: {}]
  %s6 = inlined_call_operand.hbm [shape: bf16[256,128], index: 6, kind: input, shape index: {}]
  %s7 = inlined_call_operand.vmem [shape: f32[256,16], index: 7, kind: output, shape index: {}]
  %s8 = sld [smem:[#allocation0]]
  $region58: #{tpu_custom_call.1} parent=0
    _
  %s10 = ssub.s32 1, %s8
  %s11 = scalar_select 0, %s10, %s8
  $region1: #{tpu_custom_call.1} parent=0
    #allocation2 [shape = 'u8[131072]{0}', space=vmem, size = 0x20000, scoped, tag = 'input window, operand 0, single buffered']
    #allocation3 [shape = 's32[1]{0}', space=sflag, size = 0x4, scoped, tag = 'scoped memory for tpu_custom_call.1']
    #allocation4 [shape = 'u8[131072]{0}', space=vmem, size = 0x20000, scoped, tag = 'input window, operand 1, single buffered']
    #allocation5 [shape = 's32[1]{0}', space=sflag, size = 0x4, scoped, tag = 'scoped memory for tpu_custom_call.1']
    #allocation6 [shape = 'u8[32768]{0}', space=vmem, size = 0x8000, scoped, tag = 'input window, operand 2, single buffered']
    #allocation7 [shape = 'u8[32768]{0}', space=vmem, size = 0x8000, scoped, tag = 'input window, operand 4, single buffered']
    #allocation8 [shape = 's32[1]{0}', space=sflag, size = 0x4, scoped, tag = 'scoped memory for tpu_custom_call.1']
    #allocation9 [shape = 'u8[65536]{0}', space=vmem, size = 0x10000, scoped, tag = 'input window, operand 6, single buffered']
    %12 = vsyncpa [#allocation3], 0
    %13 = vsyncpa [#allocation5], 0
    %14 = vsyncpa [#allocation8], 0
    // Predicated region
    $region2: #{tpu_custom_call.1} parent=1 // pred_check
      _
    $region3: #{tpu_custom_call.1} parent=1 // pred_check_branch
      %16 = sbr.rel (0) target = $region5
    $region4: #{tpu_custom_call.1} parent=1 // pred_region
      %s18 = ssub.s32 4096, 4096
      %19 = vsyncadd [#allocation3], %s18
      %s20 = sshll.u32 [#allocation2], 4
      %s21 = int_to_ptr.vmem [resolvable:$true] %s20
      %26 = dma.hbm_to_vmem [thread:$0]  %s0, 4096, %s21, [#allocation3], 128, 128, 8
    $region5: #{tpu_custom_call.1} parent=1 // pred_fallthru
      _
    // Predicated region
    $region6: #{tpu_custom_call.1} parent=1 // pred_check
      _
    $region7: #{tpu_custom_call.1} parent=1 // pred_check_branch
      %28 = sbr.rel (0) target = $region9
    $region8: #{tpu_custom_call.1} parent=1 // pred_region
      %s30 = ssub.s32 4096, 4096
      %31 = vsyncadd [#allocation5], %s30
      %s32 = sshll.u32 [#allocation4], 4
      %s33 = int_to_ptr.vmem [resolvable:$true] %s32
      %38 = dma.hbm_to_vmem [thread:$0]  %s1, 4096, %s33, [#allocation5], 128, 128, 8
    $region9: #{tpu_custom_call.1} parent=1 // pred_fallthru
      _
    // Predicated region
    $region10: #{tpu_custom_call.1} parent=1 // pred_check
      _
    $region11: #{tpu_custom_call.1} parent=1 // pred_check_branch
      %40 = sbr.rel (0) target = $region13
    $region12: #{tpu_custom_call.1} parent=1 // pred_region
      %s42 = ssub.s32 1024, 1024
      %43 = vsyncadd [#allocation5], %s42
      %s44 = sshll.u32 [#allocation6], 4
      %s45 = int_to_ptr.vmem [resolvable:$true] %s44
      %50 = dma.hbm_to_vmem [thread:$0]  %s2, 1024, %s45, [#allocation5], 64, 64, 4
    $region13: #{tpu_custom_call.1} parent=1 // pred_fallthru
      _
    // Predicated region
    $region14: #{tpu_custom_call.1} parent=1 // pred_check
      _
    $region15: #{tpu_custom_call.1} parent=1 // pred_check_branch
      %52 = sbr.rel (0) target = $region17
    $region16: #{tpu_custom_call.1} parent=1 // pred_region
      _
    $region17: #{tpu_custom_call.1} parent=1 // pred_fallthru
      _
    // Predicated region
    $region18: #{tpu_custom_call.1} parent=1 // pred_check
      _
    $region19: #{tpu_custom_call.1} parent=1 // pred_check_branch
      %54 = sbr.rel (0) target = $region21
    $region20: #{tpu_custom_call.1} parent=1 // pred_region
      %s56 = ssub.s32 1024, 1024
      %57 = vsyncadd [#allocation8], %s56
      %s58 = sshll.u32 [#allocation7], 4
      %s59 = int_to_ptr.vmem [resolvable:$true] %s58
      %64 = dma.hbm_to_vmem [thread:$0]  %s4, 1024, %s59, [#allocation8], 64, 64, 4
    $region21: #{tpu_custom_call.1} parent=1 // pred_fallthru
      _
    // Predicated region
    $region22: #{tpu_custom_call.1} parent=1 // pred_check
      _
    $region23: #{tpu_custom_call.1} parent=1 // pred_check_branch
      %66 = sbr.rel (0) target = $region25
    $region24: #{tpu_custom_call.1} parent=1 // pred_region
      _
    $region25: #{tpu_custom_call.1} parent=1 // pred_fallthru
      _
    // Predicated region
    $region26: #{tpu_custom_call.1} parent=1 // pred_check
      _
    $region27: #{tpu_custom_call.1} parent=1 // pred_check_branch
      %68 = sbr.rel (0) target = $region29
    $region28: #{tpu_custom_call.1} parent=1 // pred_region
      %s70 = ssub.s32 2048, 2048
      %71 = vsyncadd [#allocation8], %s70
      %s72 = sshll.u32 [#allocation9], 4
      %s73 = int_to_ptr.vmem [resolvable:$true] %s72
      %78 = dma.hbm_to_vmem [thread:$0]  %s6, 2048, %s73, [#allocation8], 64, 64, 4
    $region29: #{tpu_custom_call.1} parent=1 // pred_fallthru
      _
    // Predicated region
    $region30: #{tpu_custom_call.1} parent=1 // pred_check
      _
    $region31: #{tpu_custom_call.1} parent=1 // pred_check_branch
      %80 = sbr.rel (0) target = $region33
    $region32: #{tpu_custom_call.1} parent=1 // pred_region
      %81 = dma.done [#allocation3], 4096
    $region33: #{tpu_custom_call.1} parent=1 // pred_fallthru
      _
    // Predicated region
    $region34: #{tpu_custom_call.1} parent=1 // pred_check
      _
    $region35: #{tpu_custom_call.1} parent=1 // pred_check_branch
      %83 = sbr.rel (0) target = $region37
    $region36: #{tpu_custom_call.1} parent=1 // pred_region
      %84 = dma.done [#allocation5], 4096
    $region37: #{tpu_custom_call.1} parent=1 // pred_fallthru
      _
    // Predicated region
    $region38: #{tpu_custom_call.1} parent=1 // pred_check
      _
    $region39: #{tpu_custom_call.1} parent=1 // pred_check_branch
      %86 = sbr.rel (0) target = $region41
    $region40: #{tpu_custom_call.1} parent=1 // pred_region
      %87 = dma.done [#allocation5], 1024
    $region41: #{tpu_custom_call.1} parent=1 // pred_fallthru
      _
    // Predicated region
    $region42: #{tpu_custom_call.1} parent=1 // pred_check
      _
    $region43: #{tpu_custom_call.1} parent=1 // pred_check_branch
      %89 = sbr.rel (0) target = $region45
    $region44: #{tpu_custom_call.1} parent=1 // pred_region
      %90 = dma.done [#allocation8], 1024
    $region45: #{tpu_custom_call.1} parent=1 // pred_fallthru
      _
    // Predicated region
    $region46: #{tpu_custom_call.1} parent=1 // pred_check
      _
    $region47: #{tpu_custom_call.1} parent=1 // pred_check_branch
      %92 = sbr.rel (0) target = $region49
    $region48: #{tpu_custom_call.1} parent=1 // pred_region
      %93 = dma.done [#allocation8], 2048
    $region49: #{tpu_custom_call.1} parent=1 // pred_fallthru
      _
    %v95 = vld [vmem:[#allocation2] sm:$0xff]
    %v96 = vld [vmem:[#allocation2 + $0x8] sm:$0xff]
    %v97 = vld [vmem:[#allocation2 + $0x10] sm:$0xff]
    %v98 = vld [vmem:[#allocation2 + $0x18] sm:$0xff]
    %v99 = vld [vmem:[#allocation2 + $0x20] sm:$0xff]
    %v100 = vld [vmem:[#allocation2 + $0x28] sm:$0xff]
    %v101 = vld [vmem:[#allocation2 + $0x30] sm:$0xff]
    %v102 = vld [vmem:[#allocation2 + $0x38] sm:$0xff]
    %v103 = vld [vmem:[#allocation2 + $0x40] sm:$0xff]
    %v104 = vld [vmem:[#allocation2 + $0x48] sm:$0xff]
    %v105 = vld [vmem:[#allocation2 + $0x50] sm:$0xff]
    %v106 = vld [vmem:[#allocation2 + $0x58] sm:$0xff]
    %v107 = vld [vmem:[#allocation2 + $0x60] sm:$0xff]
    %v108 = vld [vmem:[#allocation2 + $0x68] sm:$0xff]
    %v109 = vld [vmem:[#allocation2 + $0x70] sm:$0xff]
    %v110 = vld [vmem:[#allocation2 + $0x78] sm:$0xff]
    %v111 = vld [vmem:[#allocation2 + $0x80] sm:$0xff]
    %v112 = vld [vmem:[#allocation2 + $0x88] sm:$0xff]
    %v113 = vld [vmem:[#allocation2 + $0x90] sm:$0xff]
    %v114 = vld [vmem:[#allocation2 + $0x98] sm:$0xff]
    %v115 = vld [vmem:[#allocation2 + $0xa0] sm:$0xff]
    %v116 = vld [vmem:[#allocation2 + $0xa8] sm:$0xff]
    %v117 = vld [vmem:[#allocation2 + $0xb0] sm:$0xff]
    %v118 = vld [vmem:[#allocation2 + $0xb8] sm:$0xff]
    %v119 = vld [vmem:[#allocation2 + $0xc0] sm:$0xff]
    %v120 = vld [vmem:[#allocation2 + $0xc8] sm:$0xff]
    %v121 = vld [vmem:[#allocation2 + $0xd0] sm:$0xff]
    %v122 = vld [vmem:[#allocation2 + $0xd8] sm:$0xff]
    %v123 = vld [vmem:[#allocation2 + $0xe0] sm:$0xff]
    %v124 = vld [vmem:[#allocation2 + $0xe8] sm:$0xff]
    %v125 = vld [vmem:[#allocation2 + $0xf0] sm:$0xff]
    %v126 = vld [vmem:[#allocation2 + $0xf8] sm:$0xff]
    %v127 = vld [vmem:[#allocation4] sm:$0xff]
    %v128 = vld [vmem:[#allocation4 + $0x8] sm:$0xff]
    %v129 = vld [vmem:[#allocation4 + $0x10] sm:$0xff]
    %v130 = vld [vmem:[#allocation4 + $0x18] sm:$0xff]
    %v131 = vld [vmem:[#allocation4 + $0x20] sm:$0xff]
    %v132 = vld [vmem:[#allocation4 + $0x28] sm:$0xff]
    %v133 = vld [vmem:[#allocation4 + $0x30] sm:$0xff]
    %v134 = vld [vmem:[#allocation4 + $0x38] sm:$0xff]
    %v135 = vld [vmem:[#allocation4 + $0x40] sm:$0xff]
    %v136 = vld [vmem:[#allocation4 + $0x48] sm:$0xff]
    %v137 = vld [vmem:[#allocation4 + $0x50] sm:$0xff]
    %v138 = vld [vmem:[#allocation4 + $0x58] sm:$0xff]
    %v139 = vld [vmem:[#allocation4 + $0x60] sm:$0xff]
    %v140 = vld [vmem:[#allocation4 + $0x68] sm:$0xff]
    %v141 = vld [vmem:[#allocation4 + $0x70] sm:$0xff]
    %v142 = vld [vmem:[#allocation4 + $0x78] sm:$0xff]
    %v143 = vld [vmem:[#allocation4 + $0x80] sm:$0xff]
    %v144 = vld [vmem:[#allocation4 + $0x88] sm:$0xff]
    %v145 = vld [vmem:[#allocation4 + $0x90] sm:$0xff]
    %v146 = vld [vmem:[#allocation4 + $0x98] sm:$0xff]
    %v147 = vld [vmem:[#allocation4 + $0xa0] sm:$0xff]
    %v148 = vld [vmem:[#allocation4 + $0xa8] sm:$0xff]
    %v149 = vld [vmem:[#allocation4 + $0xb0] sm:$0xff]
    %v150 = vld [vmem:[#allocation4 + $0xb8] sm:$0xff]
    %v151 = vld [vmem:[#allocation4 + $0xc0] sm:$0xff]
    %v152 = vld [vmem:[#allocation4 + $0xc8] sm:$0xff]
    %v153 = vld [vmem:[#allocation4 + $0xd0] sm:$0xff]
    %v154 = vld [vmem:[#allocation4 + $0xd8] sm:$0xff]
    %v155 = vld [vmem:[#allocation4 + $0xe0] sm:$0xff]
    %v156 = vld [vmem:[#allocation4 + $0xe8] sm:$0xff]
    %v157 = vld [vmem:[#allocation4 + $0xf0] sm:$0xff]
    %v158 = vld [vmem:[#allocation4 + $0xf8] sm:$0xff]
    %v159 = vpack.c.bf16 %v128, %v127
    %v160 = vpack.c.bf16 %v130, %v129
    %v161 = vpack.c.bf16 %v132, %v131
    %v162 = vpack.c.bf16 %v134, %v133
    %v163 = vpack.c.bf16 %v136, %v135
    %v164 = vpack.c.bf16 %v138, %v137
    %v165 = vpack.c.bf16 %v140, %v139
    %v166 = vpack.c.bf16 %v142, %v141
    %v167 = vpack.c.bf16 %v144, %v143
    %v168 = vpack.c.bf16 %v146, %v145
    %v169 = vpack.c.bf16 %v148, %v147
    %v170 = vpack.c.bf16 %v150, %v149
    %v171 = vpack.c.bf16 %v152, %v151
    %v172 = vpack.c.bf16 %v154, %v153
    %v173 = vpack.c.bf16 %v156, %v155
    %v174 = vpack.c.bf16 %v158, %v157
    %v175 = vld [vmem:[#allocation6] sm:$0xf]
    %v176 = vld [vmem:[#allocation6 + $0x4] sm:$0xf]
    %v177 = vld [vmem:[#allocation6 + $0x8] sm:$0xf]
    %v178 = vld [vmem:[#allocation6 + $0xc] sm:$0xf]
    %v179 = vld [vmem:[#allocation6 + $0x10] sm:$0xf]
    %v180 = vld [vmem:[#allocation6 + $0x14] sm:$0xf]
    %v181 = vld [vmem:[#allocation6 + $0x18] sm:$0xf]
    %v182 = vld [vmem:[#allocation6 + $0x1c] sm:$0xf]
    %v183 = vld [vmem:[#allocation6 + $0x20] sm:$0xf]
    %v184 = vld [vmem:[#allocation6 + $0x24] sm:$0xf]
    %v185 = vld [vmem:[#allocation6 + $0x28] sm:$0xf]
    %v186 = vld [vmem:[#allocation6 + $0x2c] sm:$0xf]
    %v187 = vld [vmem:[#allocation6 + $0x30] sm:$0xf]
    %v188 = vld [vmem:[#allocation6 + $0x34] sm:$0xf]
    %v189 = vld [vmem:[#allocation6 + $0x38] sm:$0xf]
    %v190 = vld [vmem:[#allocation6 + $0x3c] sm:$0xf]
    %v207 = vunpack.c.l.b16 %v175
    %v208 = vunpack.c.l.b16 %v176
    %v209 = vunpack.c.l.b16 %v177
    %v210 = vunpack.c.l.b16 %v178
    %v211 = vunpack.c.l.b16 %v179
    %v212 = vunpack.c.l.b16 %v180
    %v213 = vunpack.c.l.b16 %v181
    %v214 = vunpack.c.l.b16 %v182
    %v215 = vunpack.c.l.b16 %v183
    %v216 = vunpack.c.l.b16 %v184
    %v217 = vunpack.c.l.b16 %v185
    %v218 = vunpack.c.l.b16 %v186
    %v219 = vunpack.c.l.b16 %v187
    %v220 = vunpack.c.l.b16 %v188
    %v221 = vunpack.c.l.b16 %v189
    %v222 = vunpack.c.l.b16 %v190
    %v223 = vpack.c.b16 %v208, %v207
    %v224 = vpack.c.b16 %v210, %v209
    %v225 = vpack.c.b16 %v212, %v211
    %v226 = vpack.c.b16 %v214, %v213
    %v227 = vpack.c.b16 %v216, %v215
    %v228 = vpack.c.b16 %v218, %v217
    %v229 = vpack.c.b16 %v220, %v219
    %v230 = vpack.c.b16 %v222, %v221
    %239 = vmatprep.subr.bf16.mxu0 0
    %240 = vmatpush1.bf16.msra.mxu0 %v223
    %241 = vmatprep.subr.bf16.mxu0 0
    %242 = vmatpush1.bf16.msra.mxu0 %v224
    %243 = vmatprep.subr.bf16.mxu0 0
    %244 = vmatpush1.bf16.msra.mxu0 %v225
    %245 = vmatprep.subr.bf16.mxu0 0
    %246 = vmatpush1.bf16.msra.mxu0 %v226
    %247 = vmatprep.subr.bf16.mxu0 0
    %248 = vmatpush1.bf16.msra.mxu0 %v227
    %249 = vmatprep.subr.bf16.mxu0 0
    %250 = vmatpush1.bf16.msra.mxu0 %v228
    %251 = vmatprep.subr.bf16.mxu0 0
    %252 = vmatpush1.bf16.msra.mxu0 %v229
    %253 = vmatprep.subr.bf16.mxu0 0
    %254 = vmatpush1.bf16.msra.mxu0 %v230
    %255 = vmatprep.subr.bf16.mxu0 0
    %256 = vmatpush1.bf16.msra.mxu0 0
    %257 = vmatprep.subr.bf16.mxu0 0
    %258 = vmatpush1.bf16.msra.mxu0 0
    %259 = vmatprep.subr.bf16.mxu0 0
    %260 = vmatpush1.bf16.msra.mxu0 0
    %261 = vmatprep.subr.bf16.mxu0 0
    %262 = vmatpush1.bf16.msra.mxu0 0
    %263 = vmatprep.subr.bf16.mxu0 0
    %264 = vmatpush1.bf16.msra.mxu0 0
    %265 = vmatprep.subr.bf16.mxu0 0
    %266 = vmatpush1.bf16.msra.mxu0 0
    %267 = vmatprep.subr.bf16.mxu0 0
    %268 = vmatpush1.bf16.msra.mxu0 0
    %269 = vmatprep.subr.bf16.mxu0 0
    %270 = vmatpush1.bf16.msra.mxu0 0
    %271 = vmatprep.mubr.bf16.mxu0 0
    %272 = vmatmul.mubr.bf16.gmra.mrb[0].mxu0 %v159
    %v273 = vpop.f32.mrb[0].mxu0
    %v274 = vadd.f32 0.0, %v273
    %v275 = vpop.f32.mrb[0].mxu0
    %v276 = vpop.f32.mrb[0].mxu0
    %v277 = vadd.f32 0.0, %v276
    %v278 = vpop.f32.mrb[0].mxu0
    %279 = vmatprep.mubr.bf16.mxu0 0
    %280 = vmatmul.mubr.bf16.gmra.mrb[0].mxu0 %v160
    %v281 = vpop.f32.mrb[0].mxu0
    %v282 = vadd.f32 0.0, %v281
    %v283 = vpop.f32.mrb[0].mxu0
    %v284 = vpop.f32.mrb[0].mxu0
    %v285 = vadd.f32 0.0, %v284
    %v286 = vpop.f32.mrb[0].mxu0
    %287 = vmatprep.mubr.bf16.mxu0 0
    %288 = vmatmul.mubr.bf16.gmra.mrb[0].mxu0 %v161
    %v289 = vpop.f32.mrb[0].mxu0
    %v290 = vadd.f32 0.0, %v289
    %v291 = vpop.f32.mrb[0].mxu0
    %v292 = vpop.f32.mrb[0].mxu0
    %v293 = vadd.f32 0.0, %v292
    %v294 = vpop.f32.mrb[0].mxu0
    %295 = vmatprep.mubr.bf16.mxu0 0
    %296 = vmatmul.mubr.bf16.gmra.mrb[0].mxu0 %v162
    %v297 = vpop.f32.mrb[0].mxu0
    %v298 = vadd.f32 0.0, %v297
    %v299 = vpop.f32.mrb[0].mxu0
    %v300 = vpop.f32.mrb[0].mxu0
    %v301 = vadd.f32 0.0, %v300
    %v302 = vpop.f32.mrb[0].mxu0
    %303 = vmatprep.mubr.bf16.mxu0 0
    %304 = vmatmul.mubr.bf16.gmra.mrb[0].mxu0 %v163
    %v305 = vpop.f32.mrb[0].mxu0
    %v306 = vadd.f32 0.0, %v305
    %v307 = vpop.f32.mrb[0].mxu0
    %v308 = vpop.f32.mrb[0].mxu0
    %v309 = vadd.f32 0.0, %v308
    %v310 = vpop.f32.mrb[0].mxu0
    %311 = vmatprep.mubr.bf16.mxu0 0
    %312 = vmatmul.mubr.bf16.gmra.mrb[0].mxu0 %v164
    %v313 = vpop.f32.mrb[0].mxu0
    %v314 = vadd.f32 0.0, %v313
    %v315 = vpop.f32.mrb[0].mxu0
    %v316 = vpop.f32.mrb[0].mxu0
    %v317 = vadd.f32 0.0, %v316
    %v318 = vpop.f32.mrb[0].mxu0
    %319 = vmatprep.mubr.bf16.mxu0 0
    %320 = vmatmul.mubr.bf16.gmra.mrb[0].mxu0 %v165
    %v321 = vpop.f32.mrb[0].mxu0
    %v322 = vadd.f32 0.0, %v321
    %v323 = vpop.f32.mrb[0].mxu0
    %v324 = vpop.f32.mrb[0].mxu0
    %v325 = vadd.f32 0.0, %v324
    %v326 = vpop.f32.mrb[0].mxu0
    %327 = vmatprep.mubr.bf16.mxu0 0
    %328 = vmatmul.mubr.bf16.gmra.mrb[0].mxu0 %v166
    %v329 = vpop.f32.mrb[0].mxu0
    %v330 = vadd.f32 0.0, %v329
    %v331 = vpop.f32.mrb[0].mxu0
    %v332 = vpop.f32.mrb[0].mxu0
    %v333 = vadd.f32 0.0, %v332
    %v334 = vpop.f32.mrb[0].mxu0
    %335 = vmatprep.mubr.bf16.mxu0 0
    %336 = vmatmul.mubr.bf16.gmra.mrb[0].mxu0 %v167
    %v337 = vpop.f32.mrb[0].mxu0
    %v338 = vadd.f32 0.0, %v337
    %v339 = vpop.f32.mrb[0].mxu0
    %v340 = vpop.f32.mrb[0].mxu0
    %v341 = vadd.f32 0.0, %v340
    %v342 = vpop.f32.mrb[0].mxu0
    %343 = vmatprep.mubr.bf16.mxu0 0
    %344 = vmatmul.mubr.bf16.gmra.mrb[0].mxu0 %v168
    %v345 = vpop.f32.mrb[0].mxu0
    %v346 = vadd.f32 0.0, %v345
    %v347 = vpop.f32.mrb[0].mxu0
    %v348 = vpop.f32.mrb[0].mxu0
    %v349 = vadd.f32 0.0, %v348
    %v350 = vpop.f32.mrb[0].mxu0
    %351 = vmatprep.mubr.bf16.mxu0 0
    %352 = vmatmul.mubr.bf16.gmra.mrb[0].mxu0 %v169
    %v353 = vpop.f32.mrb[0].mxu0
    %v354 = vadd.f32 0.0, %v353
    %v355 = vpop.f32.mrb[0].mxu0
    %v356 = vpop.f32.mrb[0].mxu0
    %v357 = vadd.f32 0.0, %v356
    %v358 = vpop.f32.mrb[0].mxu0
    %359 = vmatprep.mubr.bf16.mxu0 0
    %360 = vmatmul.mubr.bf16.gmra.mrb[0].mxu0 %v170
    %v361 = vpop.f32.mrb[0].mxu0
    %v362 = vadd.f32 0.0, %v361
    %v363 = vpop.f32.mrb[0].mxu0
    %v364 = vpop.f32.mrb[0].mxu0
    %v365 = vadd.f32 0.0, %v364
    %v366 = vpop.f32.mrb[0].mxu0
    %367 = vmatprep.mubr.bf16.mxu0 0
    %368 = vmatmul.mubr.bf16.gmra.mrb[0].mxu0 %v171
    %v369 = vpop.f32.mrb[0].mxu0
    %v370 = vadd.f32 0.0, %v369
    %v371 = vpop.f32.mrb[0].mxu0
    %v372 = vpop.f32.mrb[0].mxu0
    %v373 = vadd.f32 0.0, %v372
    %v374 = vpop.f32.mrb[0].mxu0
    %375 = vmatprep.mubr.bf16.mxu0 0
    %376 = vmatmul.mubr.bf16.gmra.mrb[0].mxu0 %v172
    %v377 = vpop.f32.mrb[0].mxu0
    %v378 = vadd.f32 0.0, %v377
    %v379 = vpop.f32.mrb[0].mxu0
    %v380 = vpop.f32.mrb[0].mxu0
    %v381 = vadd.f32 0.0, %v380
    %v382 = vpop.f32.mrb[0].mxu0
    %383 = vmatprep.mubr.bf16.mxu0 0
    %384 = vmatmul.mubr.bf16.gmra.mrb[0].mxu0 %v173
    %v385 = vpop.f32.mrb[0].mxu0
    %v386 = vadd.f32 0.0, %v385
    %v387 = vpop.f32.mrb[0].mxu0
    %v388 = vpop.f32.mrb[0].mxu0
    %v389 = vadd.f32 0.0, %v388
    %v390 = vpop.f32.mrb[0].mxu0
    %391 = vmatprep.mubr.bf16.mxu0 0
    %392 = vmatmul.mubr.bf16.gmra.mrb[0].mxu0 %v174
    %v393 = vpop.f32.mrb[0].mxu0
    %v394 = vadd.f32 0.0, %v393
    %v395 = vpop.f32.mrb[0].mxu0
    %v396 = vpop.f32.mrb[0].mxu0
    %v397 = vadd.f32 0.0, %v396
    %v398 = vpop.f32.mrb[0].mxu0
    %399 = vdwg.mxu0
    %v400 = vpack.c.bf16 %v277, %v274
    %v401 = vpack.c.bf16 %v285, %v282
    %v402 = vpack.c.bf16 %v293, %v290
    %v403 = vpack.c.bf16 %v301, %v298
    %v404 = vpack.c.bf16 %v309, %v306
    %v405 = vpack.c.bf16 %v317, %v314
    %v406 = vpack.c.bf16 %v325, %v322
    %v407 = vpack.c.bf16 %v333, %v330
    %v408 = vpack.c.bf16 %v341, %v338
    %v409 = vpack.c.bf16 %v349, %v346
    %v410 = vpack.c.bf16 %v357, %v354
    %v411 = vpack.c.bf16 %v365, %v362
    %v412 = vpack.c.bf16 %v373, %v370
    %v413 = vpack.c.bf16 %v381, %v378
    %v414 = vpack.c.bf16 %v389, %v386
    %v415 = vpack.c.bf16 %v397, %v394
    %v416 = vld [vmem:[%s3] sm:$0x1]
    %v418 = vlaneseq
    %v419 = vshrl.u32 %v418, 7
    %v420 = vsub.s32 0, %v419
    %v421 = vrot.slane %v416, %v420
    %v455 = vunpack.c.l.b16 %v95
    %v456 = vunpack.c.h.b16 %v95
    %v457 = vunpack.c.l.b16 %v96
    %v458 = vunpack.c.h.b16 %v96
    %v459 = vunpack.c.l.b16 %v97
    %v460 = vunpack.c.h.b16 %v97
    %v461 = vunpack.c.l.b16 %v98
    %v462 = vunpack.c.h.b16 %v98
    %v463 = vunpack.c.l.b16 %v99
    %v464 = vunpack.c.h.b16 %v99
    %v465 = vunpack.c.l.b16 %v100
    %v466 = vunpack.c.h.b16 %v100
    %v467 = vunpack.c.l.b16 %v101
    %v468 = vunpack.c.h.b16 %v101
    %v469 = vunpack.c.l.b16 %v102
    %v470 = vunpack.c.h.b16 %v102
    %v471 = vunpack.c.l.b16 %v103
    %v472 = vunpack.c.h.b16 %v103
    %v473 = vunpack.c.l.b16 %v104
    %v474 = vunpack.c.h.b16 %v104
    %v475 = vunpack.c.l.b16 %v105
    %v476 = vunpack.c.h.b16 %v105
    %v477 = vunpack.c.l.b16 %v106
    %v478 = vunpack.c.h.b16 %v106
    %v479 = vunpack.c.l.b16 %v107
    %v480 = vunpack.c.h.b16 %v107
    %v481 = vunpack.c.l.b16 %v108
    %v482 = vunpack.c.h.b16 %v108
    %v483 = vunpack.c.l.b16 %v109
    %v484 = vunpack.c.h.b16 %v109
    %v485 = vunpack.c.l.b16 %v110
    %v486 = vunpack.c.h.b16 %v110
    %v487 = vunpack.c.l.b16 %v111
    %v488 = vunpack.c.h.b16 %v111
    %v489 = vunpack.c.l.b16 %v112
    %v490 = vunpack.c.h.b16 %v112
    %v491 = vunpack.c.l.b16 %v113
    %v492 = vunpack.c.h.b16 %v113
    %v493 = vunpack.c.l.b16 %v114
    %v494 = vunpack.c.h.b16 %v114
    %v495 = vunpack.c.l.b16 %v115
    %v496 = vunpack.c.h.b16 %v115
    %v497 = vunpack.c.l.b16 %v116
    %v498 = vunpack.c.h.b16 %v116
    %v499 = vunpack.c.l.b16 %v117
    %v500 = vunpack.c.h.b16 %v117
    %v501 = vunpack.c.l.b16 %v118
    %v502 = vunpack.c.h.b16 %v118
    %v503 = vunpack.c.l.b16 %v119
    %v504 = vunpack.c.h.b16 %v119
    %v505 = vunpack.c.l.b16 %v120
    %v506 = vunpack.c.h.b16 %v120
    %v507 = vunpack.c.l.b16 %v121
    %v508 = vunpack.c.h.b16 %v121
    %v509 = vunpack.c.l.b16 %v122
    %v510 = vunpack.c.h.b16 %v122
    %v511 = vunpack.c.l.b16 %v123
    %v512 = vunpack.c.h.b16 %v123
    %v513 = vunpack.c.l.b16 %v124
    %v514 = vunpack.c.h.b16 %v124
    %v515 = vunpack.c.l.b16 %v125
    %v516 = vunpack.c.h.b16 %v125
    %v517 = vunpack.c.l.b16 %v126
    %v518 = vunpack.c.h.b16 %v126
    %v519 = vpack.c.b16 %v457, %v455
    %v520 = vpack.c.b16 %v458, %v456
    %v521 = vpack.c.b16 %v461, %v459
    %v522 = vpack.c.b16 %v462, %v460
    %v523 = vpack.c.b16 %v465, %v463
    %v524 = vpack.c.b16 %v466, %v464
    %v525 = vpack.c.b16 %v469, %v467
    %v526 = vpack.c.b16 %v470, %v468
    %v527 = vpack.c.b16 %v473, %v471
    %v528 = vpack.c.b16 %v474, %v472
    %v529 = vpack.c.b16 %v477, %v475
    %v530 = vpack.c.b16 %v478, %v476
    %v531 = vpack.c.b16 %v481, %v479
    %v532 = vpack.c.b16 %v482, %v480
    %v533 = vpack.c.b16 %v485, %v483
    %v534 = vpack.c.b16 %v486, %v484
    %v535 = vpack.c.b16 %v489, %v487
    %v536 = vpack.c.b16 %v490, %v488
    %v537 = vpack.c.b16 %v493, %v491
    %v538 = vpack.c.b16 %v494, %v492
    %v539 = vpack.c.b16 %v497, %v495
    %v540 = vpack.c.b16 %v498, %v496
    %v541 = vpack.c.b16 %v501, %v499
    %v542 = vpack.c.b16 %v502, %v500
    %v543 = vpack.c.b16 %v505, %v503
    %v544 = vpack.c.b16 %v506, %v504
    %v545 = vpack.c.b16 %v509, %v507
    %v546 = vpack.c.b16 %v510, %v508
    %v547 = vpack.c.b16 %v513, %v511
    %v548 = vpack.c.b16 %v514, %v512
    %v549 = vpack.c.b16 %v517, %v515
    %v550 = vpack.c.b16 %v518, %v516
    %583 = vmatprep.subr.bf16.mxu0 0
    %584 = vmatpush1.bf16.msra.mxu0 %v400
    %585 = vmatprep.subr.bf16.mxu0 0
    %586 = vmatpush1.bf16.msra.mxu0 %v401
    %587 = vmatprep.subr.bf16.mxu0 0
    %588 = vmatpush1.bf16.msra.mxu0 %v402
    %589 = vmatprep.subr.bf16.mxu0 0
    %590 = vmatpush1.bf16.msra.mxu0 %v403
    %591 = vmatprep.subr.bf16.mxu0 0
    %592 = vmatpush1.bf16.msra.mxu0 %v404
    %593 = vmatprep.subr.bf16.mxu0 0
    %594 = vmatpush1.bf16.msra.mxu0 %v405
    %595 = vmatprep.subr.bf16.mxu0 0
    %596 = vmatpush1.bf16.msra.mxu0 %v406
    %597 = vmatprep.subr.bf16.mxu0 0
    %598 = vmatpush1.bf16.msra.mxu0 %v407
    %599 = vmatprep.subr.bf16.mxu0 0
    %600 = vmatpush1.bf16.msra.mxu0 %v408
    %601 = vmatprep.subr.bf16.mxu0 0
    %602 = vmatpush1.bf16.msra.mxu0 %v409
    %603 = vmatprep.subr.bf16.mxu0 0
    %604 = vmatpush1.bf16.msra.mxu0 %v410
    %605 = vmatprep.subr.bf16.mxu0 0
    %606 = vmatpush1.bf16.msra.mxu0 %v411
    %607 = vmatprep.subr.bf16.mxu0 0
    %608 = vmatpush1.bf16.msra.mxu0 %v412
    %609 = vmatprep.subr.bf16.mxu0 0
    %610 = vmatpush1.bf16.msra.mxu0 %v413
    %611 = vmatprep.subr.bf16.mxu0 0
    %612 = vmatpush1.bf16.msra.mxu0 %v414
    %613 = vmatprep.subr.bf16.mxu0 0
    %614 = vmatpush1.bf16.msra.mxu0 %v415
    %615 = vmatprep.mubr.bf16.mxu0 %v520
    %616 = vmatmul.mubr.bf16.gmra.mrb[0].mxu0 %v519
    %v617 = vpop.f32.mrb[0].mxu0
    %v618 = vadd.f32 %v421, %v617
    %v619 = vpop.f32.mrb[0].mxu0
    %v620 = vpop.f32.mrb[0].mxu0
    %v621 = vadd.f32 %v421, %v620
    %v622 = vpop.f32.mrb[0].mxu0
    %623 = vmatprep.mubr.bf16.mxu0 %v522
    %624 = vmatmul.mubr.bf16.gmra.mrb[0].mxu0 %v521
    %v625 = vpop.f32.mrb[0].mxu0
    %v626 = vadd.f32 %v421, %v625
    %v627 = vpop.f32.mrb[0].mxu0
    %v628 = vpop.f32.mrb[0].mxu0
    %v629 = vadd.f32 %v421, %v628
    %v630 = vpop.f32.mrb[0].mxu0
    %631 = vmatprep.mubr.bf16.mxu0 %v524
    %632 = vmatmul.mubr.bf16.gmra.mrb[0].mxu0 %v523
    %v633 = vpop.f32.mrb[0].mxu0
    %v634 = vadd.f32 %v421, %v633
    %v635 = vpop.f32.mrb[0].mxu0
    %v636 = vpop.f32.mrb[0].mxu0
    %v637 = vadd.f32 %v421, %v636
    %v638 = vpop.f32.mrb[0].mxu0
    %639 = vmatprep.mubr.bf16.mxu0 %v526
    %640 = vmatmul.mubr.bf16.gmra.mrb[0].mxu0 %v525
    %v641 = vpop.f32.mrb[0].mxu0
    %v642 = vadd.f32 %v421, %v641
    %v643 = vpop.f32.mrb[0].mxu0
    %v644 = vpop.f32.mrb[0].mxu0
    %v645 = vadd.f32 %v421, %v644
    %v646 = vpop.f32.mrb[0].mxu0
    %647 = vmatprep.mubr.bf16.mxu0 %v528
    %648 = vmatmul.mubr.bf16.gmra.mrb[0].mxu0 %v527
    %v649 = vpop.f32.mrb[0].mxu0
    %v650 = vadd.f32 %v421, %v649
    %v651 = vpop.f32.mrb[0].mxu0
    %v652 = vpop.f32.mrb[0].mxu0
    %v653 = vadd.f32 %v421, %v652
    %v654 = vpop.f32.mrb[0].mxu0
    %655 = vmatprep.mubr.bf16.mxu0 %v530
    %656 = vmatmul.mubr.bf16.gmra.mrb[0].mxu0 %v529
    %v657 = vpop.f32.mrb[0].mxu0
    %v658 = vadd.f32 %v421, %v657
    %v659 = vpop.f32.mrb[0].mxu0
    %v660 = vpop.f32.mrb[0].mxu0
    %v661 = vadd.f32 %v421, %v660
    %v662 = vpop.f32.mrb[0].mxu0
    %663 = vmatprep.mubr.bf16.mxu0 %v532
    %664 = vmatmul.mubr.bf16.gmra.mrb[0].mxu0 %v531
    %v665 = vpop.f32.mrb[0].mxu0
    %v666 = vadd.f32 %v421, %v665
    %v667 = vpop.f32.mrb[0].mxu0
    %v668 = vpop.f32.mrb[0].mxu0
    %v669 = vadd.f32 %v421, %v668
    %v670 = vpop.f32.mrb[0].mxu0
    %671 = vmatprep.mubr.bf16.mxu0 %v534
    %672 = vmatmul.mubr.bf16.gmra.mrb[0].mxu0 %v533
    %v673 = vpop.f32.mrb[0].mxu0
    %v674 = vadd.f32 %v421, %v673
    %v675 = vpop.f32.mrb[0].mxu0
    %v676 = vpop.f32.mrb[0].mxu0
    %v677 = vadd.f32 %v421, %v676
    %v678 = vpop.f32.mrb[0].mxu0
    %679 = vmatprep.mubr.bf16.mxu0 %v536
    %680 = vmatmul.mubr.bf16.gmra.mrb[0].mxu0 %v535
    %v681 = vpop.f32.mrb[0].mxu0
    %v682 = vadd.f32 %v421, %v681
    %v683 = vpop.f32.mrb[0].mxu0
    %v684 = vpop.f32.mrb[0].mxu0
    %v685 = vadd.f32 %v421, %v684
    %v686 = vpop.f32.mrb[0].mxu0
    %687 = vmatprep.mubr.bf16.mxu0 %v538
    %688 = vmatmul.mubr.bf16.gmra.mrb[0].mxu0 %v537
    %v689 = vpop.f32.mrb[0].mxu0
    %v690 = vadd.f32 %v421, %v689
    %v691 = vpop.f32.mrb[0].mxu0
    %v692 = vpop.f32.mrb[0].mxu0
    %v693 = vadd.f32 %v421, %v692
    %v694 = vpop.f32.mrb[0].mxu0
    %695 = vmatprep.mubr.bf16.mxu0 %v540
    %696 = vmatmul.mubr.bf16.gmra.mrb[0].mxu0 %v539
    %v697 = vpop.f32.mrb[0].mxu0
    %v698 = vadd.f32 %v421, %v697
    %v699 = vpop.f32.mrb[0].mxu0
    %v700 = vpop.f32.mrb[0].mxu0
    %v701 = vadd.f32 %v421, %v700
    %v702 = vpop.f32.mrb[0].mxu0
    %703 = vmatprep.mubr.bf16.mxu0 %v542
    %704 = vmatmul.mubr.bf16.gmra.mrb[0].mxu0 %v541
    %v705 = vpop.f32.mrb[0].mxu0
    %v706 = vadd.f32 %v421, %v705
    %v707 = vpop.f32.mrb[0].mxu0
    %v708 = vpop.f32.mrb[0].mxu0
    %v709 = vadd.f32 %v421, %v708
    %v710 = vpop.f32.mrb[0].mxu0
    %711 = vmatprep.mubr.bf16.mxu0 %v544
    %712 = vmatmul.mubr.bf16.gmra.mrb[0].mxu0 %v543
    %v713 = vpop.f32.mrb[0].mxu0
    %v714 = vadd.f32 %v421, %v713
    %v715 = vpop.f32.mrb[0].mxu0
    %v716 = vpop.f32.mrb[0].mxu0
    %v717 = vadd.f32 %v421, %v716
    %v718 = vpop.f32.mrb[0].mxu0
    %719 = vmatprep.mubr.bf16.mxu0 %v546
    %720 = vmatmul.mubr.bf16.gmra.mrb[0].mxu0 %v545
    %v721 = vpop.f32.mrb[0].mxu0
    %v722 = vadd.f32 %v421, %v721
    %v723 = vpop.f32.mrb[0].mxu0
    %v724 = vpop.f32.mrb[0].mxu0
    %v725 = vadd.f32 %v421, %v724
    %v726 = vpop.f32.mrb[0].mxu0
    %727 = vmatprep.mubr.bf16.mxu0 %v548
    %728 = vmatmul.mubr.bf16.gmra.mrb[0].mxu0 %v547
    %v729 = vpop.f32.mrb[0].mxu0
    %v730 = vadd.f32 %v421, %v729
    %v731 = vpop.f32.mrb[0].mxu0
    %v732 = vpop.f32.mrb[0].mxu0
    %v733 = vadd.f32 %v421, %v732
    %v734 = vpop.f32.mrb[0].mxu0
    %735 = vmatprep.mubr.bf16.mxu0 %v550
    %736 = vmatmul.mubr.bf16.gmra.mrb[0].mxu0 %v549
    %v737 = vpop.f32.mrb[0].mxu0
    %v738 = vadd.f32 %v421, %v737
    %v739 = vpop.f32.mrb[0].mxu0
    %v740 = vpop.f32.mrb[0].mxu0
    %v741 = vadd.f32 %v421, %v740
    %v742 = vpop.f32.mrb[0].mxu0
    %743 = vdwg.mxu0
    %v744 = vsub.f32 0.0, %v618
    %v745 = vsub.f32 0.0, %v621
    %v746 = vsub.f32 0.0, %v626
    %v747 = vsub.f32 0.0, %v629
    %v748 = vsub.f32 0.0, %v634
    %v749 = vsub.f32 0.0, %v637
    %v750 = vsub.f32 0.0, %v642
    %v751 = vsub.f32 0.0, %v645
    %v752 = vsub.f32 0.0, %v650
    %v753 = vsub.f32 0.0, %v653
    %v754 = vsub.f32 0.0, %v658
    %v755 = vsub.f32 0.0, %v661
    %v756 = vsub.f32 0.0, %v666
    %v757 = vsub.f32 0.0, %v669
    %v758 = vsub.f32 0.0, %v674
    %v759 = vsub.f32 0.0, %v677
    %v760 = vsub.f32 0.0, %v682
    %v761 = vsub.f32 0.0, %v685
    %v762 = vsub.f32 0.0, %v690
    %v763 = vsub.f32 0.0, %v693
    %v764 = vsub.f32 0.0, %v698
    %v765 = vsub.f32 0.0, %v701
    %v766 = vsub.f32 0.0, %v706
    %v767 = vsub.f32 0.0, %v709
    %v768 = vsub.f32 0.0, %v714
    %v769 = vsub.f32 0.0, %v717
    %v770 = vsub.f32 0.0, %v722
    %v771 = vsub.f32 0.0, %v725
    %v772 = vsub.f32 0.0, %v730
    %v773 = vsub.f32 0.0, %v733
    %v774 = vsub.f32 0.0, %v738
    %v775 = vsub.f32 0.0, %v741
    %v776 = vmul.f32 %v744, 1.442695
    %v777 = vpow.pop %v776
    %v778 = vmul.f32 %v745, 1.442695
    %v779 = vpow.pop %v778
    %v780 = vmul.f32 %v746, 1.442695
    %v781 = vpow.pop %v780
    %v782 = vmul.f32 %v747, 1.442695
    %v783 = vpow.pop %v782
    %v784 = vmul.f32 %v748, 1.442695
    %v785 = vpow.pop %v784
    %v786 = vmul.f32 %v749, 1.442695
    %v787 = vpow.pop %v786
    %v788 = vmul.f32 %v750, 1.442695
    %v789 = vpow.pop %v788
    %v790 = vmul.f32 %v751, 1.442695
    %v791 = vpow.pop %v790
    %v792 = vmul.f32 %v752, 1.442695
    %v793 = vpow.pop %v792
    %v794 = vmul.f32 %v753, 1.442695
    %v795 = vpow.pop %v794
    %v796 = vmul.f32 %v754, 1.442695
    %v797 = vpow.pop %v796
    %v798 = vmul.f32 %v755, 1.442695
    %v799 = vpow.pop %v798
    %v800 = vmul.f32 %v756, 1.442695
    %v801 = vpow.pop %v800
    %v802 = vmul.f32 %v757, 1.442695
    %v803 = vpow.pop %v802
    %v804 = vmul.f32 %v758, 1.442695
    %v805 = vpow.pop %v804
    %v806 = vmul.f32 %v759, 1.442695
    %v807 = vpow.pop %v806
    %v808 = vmul.f32 %v760, 1.442695
    %v809 = vpow.pop %v808
    %v810 = vmul.f32 %v761, 1.442695
    %v811 = vpow.pop %v810
    %v812 = vmul.f32 %v762, 1.442695
    %v813 = vpow.pop %v812
    %v814 = vmul.f32 %v763, 1.442695
    %v815 = vpow.pop %v814
    %v816 = vmul.f32 %v764, 1.442695
    %v817 = vpow.pop %v816
    %v818 = vmul.f32 %v765, 1.442695
    %v819 = vpow.pop %v818
    %v820 = vmul.f32 %v766, 1.442695
    %v821 = vpow.pop %v820
    %v822 = vmul.f32 %v767, 1.442695
    %v823 = vpow.pop %v822
    %v824 = vmul.f32 %v768, 1.442695
    %v825 = vpow.pop %v824
    %v826 = vmul.f32 %v769, 1.442695
    %v827 = vpow.pop %v826
    %v828 = vmul.f32 %v770, 1.442695
    %v829 = vpow.pop %v828
    %v830 = vmul.f32 %v771, 1.442695
    %v831 = vpow.pop %v830
    %v832 = vmul.f32 %v772, 1.442695
    %v833 = vpow.pop %v832
    %v834 = vmul.f32 %v773, 1.442695
    %v835 = vpow.pop %v834
    %v836 = vmul.f32 %v774, 1.442695
    %v837 = vpow.pop %v836
    %v838 = vmul.f32 %v775, 1.442695
    %v839 = vpow.pop %v838
    %v840 = vadd.f32 %v777, 1.0
    %v841 = vadd.f32 %v779, 1.0
    %v842 = vadd.f32 %v781, 1.0
    %v843 = vadd.f32 %v783, 1.0
    %v844 = vadd.f32 %v785, 1.0
    %v845 = vadd.f32 %v787, 1.0
    %v846 = vadd.f32 %v789, 1.0
    %v847 = vadd.f32 %v791, 1.0
    %v848 = vadd.f32 %v793, 1.0
    %v849 = vadd.f32 %v795, 1.0
    %v850 = vadd.f32 %v797, 1.0
    %v851 = vadd.f32 %v799, 1.0
    %v852 = vadd.f32 %v801, 1.0
    %v853 = vadd.f32 %v803, 1.0
    %v854 = vadd.f32 %v805, 1.0
    %v855 = vadd.f32 %v807, 1.0
    %v856 = vadd.f32 %v809, 1.0
    %v857 = vadd.f32 %v811, 1.0
    %v858 = vadd.f32 %v813, 1.0
    %v859 = vadd.f32 %v815, 1.0
    %v860 = vadd.f32 %v817, 1.0
    %v861 = vadd.f32 %v819, 1.0
    %v862 = vadd.f32 %v821, 1.0
    %v863 = vadd.f32 %v823, 1.0
    %v864 = vadd.f32 %v825, 1.0
    %v865 = vadd.f32 %v827, 1.0
    %v866 = vadd.f32 %v829, 1.0
    %v867 = vadd.f32 %v831, 1.0
    %v868 = vadd.f32 %v833, 1.0
    %v869 = vadd.f32 %v835, 1.0
    %v870 = vadd.f32 %v837, 1.0
    %v871 = vadd.f32 %v839, 1.0
    %v872 = vrcp.pop %v840
    %v873 = vrcp.pop %v841
    %v874 = vrcp.pop %v842
    %v875 = vrcp.pop %v843
    %v876 = vrcp.pop %v844
    %v877 = vrcp.pop %v845
    %v878 = vrcp.pop %v846
    %v879 = vrcp.pop %v847
    %v880 = vrcp.pop %v848
    %v881 = vrcp.pop %v849
    %v882 = vrcp.pop %v850
    %v883 = vrcp.pop %v851
    %v884 = vrcp.pop %v852
    %v885 = vrcp.pop %v853
    %v886 = vrcp.pop %v854
    %v887 = vrcp.pop %v855
    %v888 = vrcp.pop %v856
    %v889 = vrcp.pop %v857
    %v890 = vrcp.pop %v858
    %v891 = vrcp.pop %v859
    %v892 = vrcp.pop %v860
    %v893 = vrcp.pop %v861
    %v894 = vrcp.pop %v862
    %v895 = vrcp.pop %v863
    %v896 = vrcp.pop %v864
    %v897 = vrcp.pop %v865
    %v898 = vrcp.pop %v866
    %v899 = vrcp.pop %v867
    %v900 = vrcp.pop %v868
    %v901 = vrcp.pop %v869
    %v902 = vrcp.pop %v870
    %v903 = vrcp.pop %v871
    %v904 = vld [vmem:[#allocation9] sm:$0xf]
    %v905 = vld [vmem:[#allocation9 + $0x4] sm:$0xf]
    %v906 = vld [vmem:[#allocation9 + $0x8] sm:$0xf]
    %v907 = vld [vmem:[#allocation9 + $0xc] sm:$0xf]
    %v908 = vld [vmem:[#allocation9 + $0x10] sm:$0xf]
    %v909 = vld [vmem:[#allocation9 + $0x14] sm:$0xf]
    %v910 = vld [vmem:[#allocation9 + $0x18] sm:$0xf]
    %v911 = vld [vmem:[#allocation9 + $0x1c] sm:$0xf]
    %v912 = vld [vmem:[#allocation9 + $0x20] sm:$0xf]
    %v913 = vld [vmem:[#allocation9 + $0x24] sm:$0xf]
    %v914 = vld [vmem:[#allocation9 + $0x28] sm:$0xf]
    %v915 = vld [vmem:[#allocation9 + $0x2c] sm:$0xf]
    %v916 = vld [vmem:[#allocation9 + $0x30] sm:$0xf]
    %v917 = vld [vmem:[#allocation9 + $0x34] sm:$0xf]
    %v918 = vld [vmem:[#allocation9 + $0x38] sm:$0xf]
    %v919 = vld [vmem:[#allocation9 + $0x3c] sm:$0xf]
    %v920 = vld [vmem:[#allocation9 + $0x40] sm:$0xf]
    %v921 = vld [vmem:[#allocation9 + $0x44] sm:$0xf]
    %v922 = vld [vmem:[#allocation9 + $0x48] sm:$0xf]
    %v923 = vld [vmem:[#allocation9 + $0x4c] sm:$0xf]
    %v924 = vld [vmem:[#allocation9 + $0x50] sm:$0xf]
    %v925 = vld [vmem:[#allocation9 + $0x54] sm:$0xf]
    %v926 = vld [vmem:[#allocation9 + $0x58] sm:$0xf]
    %v927 = vld [vmem:[#allocation9 + $0x5c] sm:$0xf]
    %v928 = vld [vmem:[#allocation9 + $0x60] sm:$0xf]
    %v929 = vld [vmem:[#allocation9 + $0x64] sm:$0xf]
    %v930 = vld [vmem:[#allocation9 + $0x68] sm:$0xf]
    %v931 = vld [vmem:[#allocation9 + $0x6c] sm:$0xf]
    %v932 = vld [vmem:[#allocation9 + $0x70] sm:$0xf]
    %v933 = vld [vmem:[#allocation9 + $0x74] sm:$0xf]
    %v934 = vld [vmem:[#allocation9 + $0x78] sm:$0xf]
    %v935 = vld [vmem:[#allocation9 + $0x7c] sm:$0xf]
    %v936 = vunpack.c.l.bf16 %v904
    %v937 = vunpack.c.l.bf16 %v905
    %v938 = vunpack.c.l.bf16 %v906
    %v939 = vunpack.c.l.bf16 %v907
    %v940 = vunpack.c.l.bf16 %v908
    %v941 = vunpack.c.l.bf16 %v909
    %v942 = vunpack.c.l.bf16 %v910
    %v943 = vunpack.c.l.bf16 %v911
    %v944 = vunpack.c.l.bf16 %v912
    %v945 = vunpack.c.l.bf16 %v913
    %v946 = vunpack.c.l.bf16 %v914
    %v947 = vunpack.c.l.bf16 %v915
    %v948 = vunpack.c.l.bf16 %v916
    %v949 = vunpack.c.l.bf16 %v917
    %v950 = vunpack.c.l.bf16 %v918
    %v951 = vunpack.c.l.bf16 %v919
    %v952 = vunpack.c.l.bf16 %v920
    %v953 = vunpack.c.l.bf16 %v921
    %v954 = vunpack.c.l.bf16 %v922
    %v955 = vunpack.c.l.bf16 %v923
    %v956 = vunpack.c.l.bf16 %v924
    %v957 = vunpack.c.l.bf16 %v925
    %v958 = vunpack.c.l.bf16 %v926
    %v959 = vunpack.c.l.bf16 %v927
    %v960 = vunpack.c.l.bf16 %v928
    %v961 = vunpack.c.l.bf16 %v929
    %v962 = vunpack.c.l.bf16 %v930
    %v963 = vunpack.c.l.bf16 %v931
    %v964 = vunpack.c.l.bf16 %v932
    %v965 = vunpack.c.l.bf16 %v933
    %v966 = vunpack.c.l.bf16 %v934
    %v967 = vunpack.c.l.bf16 %v935
    %v968 = vmul.f32 %v872, %v936
    %v969 = vmul.f32 %v873, %v937
    %v970 = vmul.f32 %v874, %v938
    %v971 = vmul.f32 %v875, %v939
    %v972 = vmul.f32 %v876, %v940
    %v973 = vmul.f32 %v877, %v941
    %v974 = vmul.f32 %v878, %v942
    %v975 = vmul.f32 %v879, %v943
    %v976 = vmul.f32 %v880, %v944
    %v977 = vmul.f32 %v881, %v945
    %v978 = vmul.f32 %v882, %v946
    %v979 = vmul.f32 %v883, %v947
    %v980 = vmul.f32 %v884, %v948
    %v981 = vmul.f32 %v885, %v949
    %v982 = vmul.f32 %v886, %v950
    %v983 = vmul.f32 %v887, %v951
    %v984 = vmul.f32 %v888, %v952
    %v985 = vmul.f32 %v889, %v953
    %v986 = vmul.f32 %v890, %v954
    %v987 = vmul.f32 %v891, %v955
    %v988 = vmul.f32 %v892, %v956
    %v989 = vmul.f32 %v893, %v957
    %v990 = vmul.f32 %v894, %v958
    %v991 = vmul.f32 %v895, %v959
    %v992 = vmul.f32 %v896, %v960
    %v993 = vmul.f32 %v897, %v961
    %v994 = vmul.f32 %v898, %v962
    %v995 = vmul.f32 %v899, %v963
    %v996 = vmul.f32 %v900, %v964
    %v997 = vmul.f32 %v901, %v965
    %v998 = vmul.f32 %v902, %v966
    %v999 = vmul.f32 %v903, %v967
    %v1000 = vpack.c.bf16 %v969, %v968
    %v1001 = vpack.c.bf16 %v971, %v970
    %v1002 = vpack.c.bf16 %v973, %v972
    %v1003 = vpack.c.bf16 %v975, %v974
    %v1004 = vpack.c.bf16 %v977, %v976
    %v1005 = vpack.c.bf16 %v979, %v978
    %v1006 = vpack.c.bf16 %v981, %v980
    %v1007 = vpack.c.bf16 %v983, %v982
    %v1008 = vpack.c.bf16 %v985, %v984
    %v1009 = vpack.c.bf16 %v987, %v986
    %v1010 = vpack.c.bf16 %v989, %v988
    %v1011 = vpack.c.bf16 %v991, %v990
    %v1012 = vpack.c.bf16 %v993, %v992
    %v1013 = vpack.c.bf16 %v995, %v994
    %v1014 = vpack.c.bf16 %v997, %v996
    %v1015 = vpack.c.bf16 %v999, %v998
    %v1016 = vld [vmem:[#allocation7] sm:$0xf]
    %v1017 = vld [vmem:[#allocation7 + $0x4] sm:$0xf]
    %v1018 = vld [vmem:[#allocation7 + $0x8] sm:$0xf]
    %v1019 = vld [vmem:[#allocation7 + $0xc] sm:$0xf]
    %v1020 = vld [vmem:[#allocation7 + $0x10] sm:$0xf]
    %v1021 = vld [vmem:[#allocation7 + $0x14] sm:$0xf]
    %v1022 = vld [vmem:[#allocation7 + $0x18] sm:$0xf]
    %v1023 = vld [vmem:[#allocation7 + $0x1c] sm:$0xf]
    %v1024 = vld [vmem:[#allocation7 + $0x20] sm:$0xf]
    %v1025 = vld [vmem:[#allocation7 + $0x24] sm:$0xf]
    %v1026 = vld [vmem:[#allocation7 + $0x28] sm:$0xf]
    %v1027 = vld [vmem:[#allocation7 + $0x2c] sm:$0xf]
    %v1028 = vld [vmem:[#allocation7 + $0x30] sm:$0xf]
    %v1029 = vld [vmem:[#allocation7 + $0x34] sm:$0xf]
    %v1030 = vld [vmem:[#allocation7 + $0x38] sm:$0xf]
    %v1031 = vld [vmem:[#allocation7 + $0x3c] sm:$0xf]
    %v1048 = vunpack.c.l.b16 %v1016
    %v1049 = vunpack.c.l.b16 %v1017
    %v1050 = vunpack.c.l.b16 %v1018
    %v1051 = vunpack.c.l.b16 %v1019
    %v1052 = vunpack.c.l.b16 %v1020
    %v1053 = vunpack.c.l.b16 %v1021
    %v1054 = vunpack.c.l.b16 %v1022
    %v1055 = vunpack.c.l.b16 %v1023
    %v1056 = vunpack.c.l.b16 %v1024
    %v1057 = vunpack.c.l.b16 %v1025
    %v1058 = vunpack.c.l.b16 %v1026
    %v1059 = vunpack.c.l.b16 %v1027
    %v1060 = vunpack.c.l.b16 %v1028
    %v1061 = vunpack.c.l.b16 %v1029
    %v1062 = vunpack.c.l.b16 %v1030
    %v1063 = vunpack.c.l.b16 %v1031
    %v1064 = vpack.c.b16 %v1049, %v1048
    %v1065 = vpack.c.b16 %v1051, %v1050
    %v1066 = vpack.c.b16 %v1053, %v1052
    %v1067 = vpack.c.b16 %v1055, %v1054
    %v1068 = vpack.c.b16 %v1057, %v1056
    %v1069 = vpack.c.b16 %v1059, %v1058
    %v1070 = vpack.c.b16 %v1061, %v1060
    %v1071 = vpack.c.b16 %v1063, %v1062
    %1080 = vmatprep.subr.bf16.mxu0 0
    %1081 = vmatpush1.bf16.msra.mxu0 %v1064
    %1082 = vmatprep.subr.bf16.mxu0 0
    %1083 = vmatpush1.bf16.msra.mxu0 %v1065
    %1084 = vmatprep.subr.bf16.mxu0 0
    %1085 = vmatpush1.bf16.msra.mxu0 %v1066
    %1086 = vmatprep.subr.bf16.mxu0 0
    %1087 = vmatpush1.bf16.msra.mxu0 %v1067
    %1088 = vmatprep.subr.bf16.mxu0 0
    %1089 = vmatpush1.bf16.msra.mxu0 %v1068
    %1090 = vmatprep.subr.bf16.mxu0 0
    %1091 = vmatpush1.bf16.msra.mxu0 %v1069
    %1092 = vmatprep.subr.bf16.mxu0 0
    %1093 = vmatpush1.bf16.msra.mxu0 %v1070
    %1094 = vmatprep.subr.bf16.mxu0 0
    %1095 = vmatpush1.bf16.msra.mxu0 %v1071
    %1096 = vmatprep.subr.bf16.mxu0 0
    %1097 = vmatpush1.bf16.msra.mxu0 0
    %1098 = vmatprep.subr.bf16.mxu0 0
    %1099 = vmatpush1.bf16.msra.mxu0 0
    %1100 = vmatprep.subr.bf16.mxu0 0
    %1101 = vmatpush1.bf16.msra.mxu0 0
    %1102 = vmatprep.subr.bf16.mxu0 0
    %1103 = vmatpush1.bf16.msra.mxu0 0
    %1104 = vmatprep.subr.bf16.mxu0 0
    %1105 = vmatpush1.bf16.msra.mxu0 0
    %1106 = vmatprep.subr.bf16.mxu0 0
    %1107 = vmatpush1.bf16.msra.mxu0 0
    %1108 = vmatprep.subr.bf16.mxu0 0
    %1109 = vmatpush1.bf16.msra.mxu0 0
    %1110 = vmatprep.subr.bf16.mxu0 0
    %1111 = vmatpush1.bf16.msra.mxu0 0
    %1112 = vmatprep.mubr.bf16.mxu0 0
    %1113 = vmatmul.mubr.bf16.gmra.mrb[0].mxu0 %v1000
    %v1114 = vpop.f32.mrb[0].mxu0
    %v1115 = vadd.f32 0.0, %v1114
    %v1116 = vpop.f32.mrb[0].mxu0
    %v1117 = vpop.f32.mrb[0].mxu0
    %v1118 = vadd.f32 0.0, %v1117
    %v1119 = vpop.f32.mrb[0].mxu0
    %1120 = vmatprep.mubr.bf16.mxu0 0
    %1121 = vmatmul.mubr.bf16.gmra.mrb[0].mxu0 %v1001
    %v1122 = vpop.f32.mrb[0].mxu0
    %v1123 = vadd.f32 0.0, %v1122
    %v1124 = vpop.f32.mrb[0].mxu0
    %v1125 = vpop.f32.mrb[0].mxu0
    %v1126 = vadd.f32 0.0, %v1125
    %v1127 = vpop.f32.mrb[0].mxu0
    %1128 = vmatprep.mubr.bf16.mxu0 0
    %1129 = vmatmul.mubr.bf16.gmra.mrb[0].mxu0 %v1002
    %v1130 = vpop.f32.mrb[0].mxu0
    %v1131 = vadd.f32 0.0, %v1130
    %v1132 = vpop.f32.mrb[0].mxu0
    %v1133 = vpop.f32.mrb[0].mxu0
    %v1134 = vadd.f32 0.0, %v1133
    %v1135 = vpop.f32.mrb[0].mxu0
    %1136 = vmatprep.mubr.bf16.mxu0 0
    %1137 = vmatmul.mubr.bf16.gmra.mrb[0].mxu0 %v1003
    %v1138 = vpop.f32.mrb[0].mxu0
    %v1139 = vadd.f32 0.0, %v1138
    %v1140 = vpop.f32.mrb[0].mxu0
    %v1141 = vpop.f32.mrb[0].mxu0
    %v1142 = vadd.f32 0.0, %v1141
    %v1143 = vpop.f32.mrb[0].mxu0
    %1144 = vmatprep.mubr.bf16.mxu0 0
    %1145 = vmatmul.mubr.bf16.gmra.mrb[0].mxu0 %v1004
    %v1146 = vpop.f32.mrb[0].mxu0
    %v1147 = vadd.f32 0.0, %v1146
    %v1148 = vpop.f32.mrb[0].mxu0
    %v1149 = vpop.f32.mrb[0].mxu0
    %v1150 = vadd.f32 0.0, %v1149
    %v1151 = vpop.f32.mrb[0].mxu0
    %1152 = vmatprep.mubr.bf16.mxu0 0
    %1153 = vmatmul.mubr.bf16.gmra.mrb[0].mxu0 %v1005
    %v1154 = vpop.f32.mrb[0].mxu0
    %v1155 = vadd.f32 0.0, %v1154
    %v1156 = vpop.f32.mrb[0].mxu0
    %v1157 = vpop.f32.mrb[0].mxu0
    %v1158 = vadd.f32 0.0, %v1157
    %v1159 = vpop.f32.mrb[0].mxu0
    %1160 = vmatprep.mubr.bf16.mxu0 0
    %1161 = vmatmul.mubr.bf16.gmra.mrb[0].mxu0 %v1006
    %v1162 = vpop.f32.mrb[0].mxu0
    %v1163 = vadd.f32 0.0, %v1162
    %v1164 = vpop.f32.mrb[0].mxu0
    %v1165 = vpop.f32.mrb[0].mxu0
    %v1166 = vadd.f32 0.0, %v1165
    %v1167 = vpop.f32.mrb[0].mxu0
    %1168 = vmatprep.mubr.bf16.mxu0 0
    %1169 = vmatmul.mubr.bf16.gmra.mrb[0].mxu0 %v1007
    %v1170 = vpop.f32.mrb[0].mxu0
    %v1171 = vadd.f32 0.0, %v1170
    %v1172 = vpop.f32.mrb[0].mxu0
    %v1173 = vpop.f32.mrb[0].mxu0
    %v1174 = vadd.f32 0.0, %v1173
    %v1175 = vpop.f32.mrb[0].mxu0
    %1176 = vmatprep.mubr.bf16.mxu0 0
    %1177 = vmatmul.mubr.bf16.gmra.mrb[0].mxu0 %v1008
    %v1178 = vpop.f32.mrb[0].mxu0
    %v1179 = vadd.f32 0.0, %v1178
    %v1180 = vpop.f32.mrb[0].mxu0
    %v1181 = vpop.f32.mrb[0].mxu0
    %v1182 = vadd.f32 0.0, %v1181
    %v1183 = vpop.f32.mrb[0].mxu0
    %1184 = vmatprep.mubr.bf16.mxu0 0
    %1185 = vmatmul.mubr.bf16.gmra.mrb[0].mxu0 %v1009
    %v1186 = vpop.f32.mrb[0].mxu0
    %v1187 = vadd.f32 0.0, %v1186
    %v1188 = vpop.f32.mrb[0].mxu0
    %v1189 = vpop.f32.mrb[0].mxu0
    %v1190 = vadd.f32 0.0, %v1189
    %v1191 = vpop.f32.mrb[0].mxu0
    %1192 = vmatprep.mubr.bf16.mxu0 0
    %1193 = vmatmul.mubr.bf16.gmra.mrb[0].mxu0 %v1010
    %v1194 = vpop.f32.mrb[0].mxu0
    %v1195 = vadd.f32 0.0, %v1194
    %v1196 = vpop.f32.mrb[0].mxu0
    %v1197 = vpop.f32.mrb[0].mxu0
    %v1198 = vadd.f32 0.0, %v1197
    %v1199 = vpop.f32.mrb[0].mxu0
    %1200 = vmatprep.mubr.bf16.mxu0 0
    %1201 = vmatmul.mubr.bf16.gmra.mrb[0].mxu0 %v1011
    %v1202 = vpop.f32.mrb[0].mxu0
    %v1203 = vadd.f32 0.0, %v1202
    %v1204 = vpop.f32.mrb[0].mxu0
    %v1205 = vpop.f32.mrb[0].mxu0
    %v1206 = vadd.f32 0.0, %v1205
    %v1207 = vpop.f32.mrb[0].mxu0
    %1208 = vmatprep.mubr.bf16.mxu0 0
    %1209 = vmatmul.mubr.bf16.gmra.mrb[0].mxu0 %v1012
    %v1210 = vpop.f32.mrb[0].mxu0
    %v1211 = vadd.f32 0.0, %v1210
    %v1212 = vpop.f32.mrb[0].mxu0
    %v1213 = vpop.f32.mrb[0].mxu0
    %v1214 = vadd.f32 0.0, %v1213
    %v1215 = vpop.f32.mrb[0].mxu0
    %1216 = vmatprep.mubr.bf16.mxu0 0
    %1217 = vmatmul.mubr.bf16.gmra.mrb[0].mxu0 %v1013
    %v1218 = vpop.f32.mrb[0].mxu0
    %v1219 = vadd.f32 0.0, %v1218
    %v1220 = vpop.f32.mrb[0].mxu0
    %v1221 = vpop.f32.mrb[0].mxu0
    %v1222 = vadd.f32 0.0, %v1221
    %v1223 = vpop.f32.mrb[0].mxu0
    %1224 = vmatprep.mubr.bf16.mxu0 0
    %1225 = vmatmul.mubr.bf16.gmra.mrb[0].mxu0 %v1014
    %v1226 = vpop.f32.mrb[0].mxu0
    %v1227 = vadd.f32 0.0, %v1226
    %v1228 = vpop.f32.mrb[0].mxu0
    %v1229 = vpop.f32.mrb[0].mxu0
    %v1230 = vadd.f32 0.0, %v1229
    %v1231 = vpop.f32.mrb[0].mxu0
    %1232 = vmatprep.mubr.bf16.mxu0 0
    %1233 = vmatmul.mubr.bf16.gmra.mrb[0].mxu0 %v1015
    %v1234 = vpop.f32.mrb[0].mxu0
    %v1235 = vadd.f32 0.0, %v1234
    %v1236 = vpop.f32.mrb[0].mxu0
    %v1237 = vpop.f32.mrb[0].mxu0
    %v1238 = vadd.f32 0.0, %v1237
    %v1239 = vpop.f32.mrb[0].mxu0
    %1240 = vdwg.mxu0
    %v1241 = vpack.c.bf16 %v1118, %v1115
    %v1242 = vpack.c.bf16 %v1126, %v1123
    %v1243 = vpack.c.bf16 %v1134, %v1131
    %v1244 = vpack.c.bf16 %v1142, %v1139
    %v1245 = vpack.c.bf16 %v1150, %v1147
    %v1246 = vpack.c.bf16 %v1158, %v1155
    %v1247 = vpack.c.bf16 %v1166, %v1163
    %v1248 = vpack.c.bf16 %v1174, %v1171
    %v1249 = vpack.c.bf16 %v1182, %v1179
    %v1250 = vpack.c.bf16 %v1190, %v1187
    %v1251 = vpack.c.bf16 %v1198, %v1195
    %v1252 = vpack.c.bf16 %v1206, %v1203
    %v1253 = vpack.c.bf16 %v1214, %v1211
    %v1254 = vpack.c.bf16 %v1222, %v1219
    %v1255 = vpack.c.bf16 %v1230, %v1227
    %v1256 = vpack.c.bf16 %v1238, %v1235
    %1257 = vmatprep.subr.bf16.mxu0 0
    %1258 = vmatpush1.bf16.msra.mxu0 %v1241
    %1259 = vmatprep.subr.bf16.mxu0 0
    %1260 = vmatpush1.bf16.msra.mxu0 %v1242
    %1261 = vmatprep.subr.bf16.mxu0 0
    %1262 = vmatpush1.bf16.msra.mxu0 %v1243
    %1263 = vmatprep.subr.bf16.mxu0 0
    %1264 = vmatpush1.bf16.msra.mxu0 %v1244
    %1265 = vmatprep.subr.bf16.mxu0 0
    %1266 = vmatpush1.bf16.msra.mxu0 %v1245
    %1267 = vmatprep.subr.bf16.mxu0 0
    %1268 = vmatpush1.bf16.msra.mxu0 %v1246
    %1269 = vmatprep.subr.bf16.mxu0 0
    %1270 = vmatpush1.bf16.msra.mxu0 %v1247
    %1271 = vmatprep.subr.bf16.mxu0 0
    %1272 = vmatpush1.bf16.msra.mxu0 %v1248
    %1273 = vmatprep.subr.bf16.mxu0 0
    %1274 = vmatpush1.bf16.msra.mxu0 %v1249
    %1275 = vmatprep.subr.bf16.mxu0 0
    %1276 = vmatpush1.bf16.msra.mxu0 %v1250
    %1277 = vmatprep.subr.bf16.mxu0 0
    %1278 = vmatpush1.bf16.msra.mxu0 %v1251
    %1279 = vmatprep.subr.bf16.mxu0 0
    %1280 = vmatpush1.bf16.msra.mxu0 %v1252
    %1281 = vmatprep.subr.bf16.mxu0 0
    %1282 = vmatpush1.bf16.msra.mxu0 %v1253
    %1283 = vmatprep.subr.bf16.mxu0 0
    %1284 = vmatpush1.bf16.msra.mxu0 %v1254
    %1285 = vmatprep.subr.bf16.mxu0 0
    %1286 = vmatpush1.bf16.msra.mxu0 %v1255
    %1287 = vmatprep.subr.bf16.mxu0 0
    %1288 = vmatpush1.bf16.msra.mxu0 %v1256
    %1289 = vmatprep.mubr.bf16.mxu0 %v520
    %1290 = vmatmul.mubr.bf16.gmra.mrb[0].mxu0 %v519
    %v1291 = vpop.f32.mrb[0].mxu0
    %v1292 = vadd.f32 0.0, %v1291
    %v1293 = vpop.f32.mrb[0].mxu0
    %v1294 = vpop.f32.mrb[0].mxu0
    %v1295 = vadd.f32 0.0, %v1294
    %v1296 = vpop.f32.mrb[0].mxu0
    %1297 = vmatprep.mubr.bf16.mxu0 %v522
    %1298 = vmatmul.mubr.bf16.gmra.mrb[0].mxu0 %v521
    %v1299 = vpop.f32.mrb[0].mxu0
    %v1300 = vadd.f32 0.0, %v1299
    %v1301 = vpop.f32.mrb[0].mxu0
    %v1302 = vpop.f32.mrb[0].mxu0
    %v1303 = vadd.f32 0.0, %v1302
    %v1304 = vpop.f32.mrb[0].mxu0
    %1305 = vmatprep.mubr.bf16.mxu0 %v524
    %1306 = vmatmul.mubr.bf16.gmra.mrb[0].mxu0 %v523
    %v1307 = vpop.f32.mrb[0].mxu0
    %v1308 = vadd.f32 0.0, %v1307
    %v1309 = vpop.f32.mrb[0].mxu0
    %v1310 = vpop.f32.mrb[0].mxu0
    %v1311 = vadd.f32 0.0, %v1310
    %v1312 = vpop.f32.mrb[0].mxu0
    %1313 = vmatprep.mubr.bf16.mxu0 %v526
    %1314 = vmatmul.mubr.bf16.gmra.mrb[0].mxu0 %v525
    %v1315 = vpop.f32.mrb[0].mxu0
    %v1316 = vadd.f32 0.0, %v1315
    %v1317 = vpop.f32.mrb[0].mxu0
    %v1318 = vpop.f32.mrb[0].mxu0
    %v1319 = vadd.f32 0.0, %v1318
    %v1320 = vpop.f32.mrb[0].mxu0
    %1321 = vmatprep.mubr.bf16.mxu0 %v528
    %1322 = vmatmul.mubr.bf16.gmra.mrb[0].mxu0 %v527
    %v1323 = vpop.f32.mrb[0].mxu0
    %v1324 = vadd.f32 0.0, %v1323
    %v1325 = vpop.f32.mrb[0].mxu0
    %v1326 = vpop.f32.mrb[0].mxu0
    %v1327 = vadd.f32 0.0, %v1326
    %v1328 = vpop.f32.mrb[0].mxu0
    %1329 = vmatprep.mubr.bf16.mxu0 %v530
    %1330 = vmatmul.mubr.bf16.gmra.mrb[0].mxu0 %v529
    %v1331 = vpop.f32.mrb[0].mxu0
    %v1332 = vadd.f32 0.0, %v1331
    %v1333 = vpop.f32.mrb[0].mxu0
    %v1334 = vpop.f32.mrb[0].mxu0
    %v1335 = vadd.f32 0.0, %v1334
    %v1336 = vpop.f32.mrb[0].mxu0
    %1337 = vmatprep.mubr.bf16.mxu0 %v532
    %1338 = vmatmul.mubr.bf16.gmra.mrb[0].mxu0 %v531
    %v1339 = vpop.f32.mrb[0].mxu0
    %v1340 = vadd.f32 0.0, %v1339
    %v1341 = vpop.f32.mrb[0].mxu0
    %v1342 = vpop.f32.mrb[0].mxu0
    %v1343 = vadd.f32 0.0, %v1342
    %v1344 = vpop.f32.mrb[0].mxu0
    %1345 = vmatprep.mubr.bf16.mxu0 %v534
    %1346 = vmatmul.mubr.bf16.gmra.mrb[0].mxu0 %v533
    %v1347 = vpop.f32.mrb[0].mxu0
    %v1348 = vadd.f32 0.0, %v1347
    %v1349 = vpop.f32.mrb[0].mxu0
    %v1350 = vpop.f32.mrb[0].mxu0
    %v1351 = vadd.f32 0.0, %v1350
    %v1352 = vpop.f32.mrb[0].mxu0
    %1353 = vmatprep.mubr.bf16.mxu0 %v536
    %1354 = vmatmul.mubr.bf16.gmra.mrb[0].mxu0 %v535
    %v1355 = vpop.f32.mrb[0].mxu0
    %v1356 = vadd.f32 0.0, %v1355
    %v1357 = vpop.f32.mrb[0].mxu0
    %v1358 = vpop.f32.mrb[0].mxu0
    %v1359 = vadd.f32 0.0, %v1358
    %v1360 = vpop.f32.mrb[0].mxu0
    %1361 = vmatprep.mubr.bf16.mxu0 %v538
    %1362 = vmatmul.mubr.bf16.gmra.mrb[0].mxu0 %v537
    %v1363 = vpop.f32.mrb[0].mxu0
    %v1364 = vadd.f32 0.0, %v1363
    %v1365 = vpop.f32.mrb[0].mxu0
    %v1366 = vpop.f32.mrb[0].mxu0
    %v1367 = vadd.f32 0.0, %v1366
    %v1368 = vpop.f32.mrb[0].mxu0
    %1369 = vmatprep.mubr.bf16.mxu0 %v540
    %1370 = vmatmul.mubr.bf16.gmra.mrb[0].mxu0 %v539
    %v1371 = vpop.f32.mrb[0].mxu0
    %v1372 = vadd.f32 0.0, %v1371
    %v1373 = vpop.f32.mrb[0].mxu0
    %v1374 = vpop.f32.mrb[0].mxu0
    %v1375 = vadd.f32 0.0, %v1374
    %v1376 = vpop.f32.mrb[0].mxu0
    %1377 = vmatprep.mubr.bf16.mxu0 %v542
    %1378 = vmatmul.mubr.bf16.gmra.mrb[0].mxu0 %v541
    %v1379 = vpop.f32.mrb[0].mxu0
    %v1380 = vadd.f32 0.0, %v1379
    %v1381 = vpop.f32.mrb[0].mxu0
    %v1382 = vpop.f32.mrb[0].mxu0
    %v1383 = vadd.f32 0.0, %v1382
    %v1384 = vpop.f32.mrb[0].mxu0
    %1385 = vmatprep.mubr.bf16.mxu0 %v544
    %1386 = vmatmul.mubr.bf16.gmra.mrb[0].mxu0 %v543
    %v1387 = vpop.f32.mrb[0].mxu0
    %v1388 = vadd.f32 0.0, %v1387
    %v1389 = vpop.f32.mrb[0].mxu0
    %v1390 = vpop.f32.mrb[0].mxu0
    %v1391 = vadd.f32 0.0, %v1390
    %v1392 = vpop.f32.mrb[0].mxu0
    %1393 = vmatprep.mubr.bf16.mxu0 %v546
    %1394 = vmatmul.mubr.bf16.gmra.mrb[0].mxu0 %v545
    %v1395 = vpop.f32.mrb[0].mxu0
    %v1396 = vadd.f32 0.0, %v1395
    %v1397 = vpop.f32.mrb[0].mxu0
    %v1398 = vpop.f32.mrb[0].mxu0
    %v1399 = vadd.f32 0.0, %v1398
    %v1400 = vpop.f32.mrb[0].mxu0
    %1401 = vmatprep.mubr.bf16.mxu0 %v548
    %1402 = vmatmul.mubr.bf16.gmra.mrb[0].mxu0 %v547
    %v1403 = vpop.f32.mrb[0].mxu0
    %v1404 = vadd.f32 0.0, %v1403
    %v1405 = vpop.f32.mrb[0].mxu0
    %v1406 = vpop.f32.mrb[0].mxu0
    %v1407 = vadd.f32 0.0, %v1406
    %v1408 = vpop.f32.mrb[0].mxu0
    %1409 = vmatprep.mubr.bf16.mxu0 %v550
    %1410 = vmatmul.mubr.bf16.gmra.mrb[0].mxu0 %v549
    %v1411 = vpop.f32.mrb[0].mxu0
    %v1412 = vadd.f32 0.0, %v1411
    %v1413 = vpop.f32.mrb[0].mxu0
    %v1414 = vpop.f32.mrb[0].mxu0
    %v1415 = vadd.f32 0.0, %v1414
    %v1416 = vpop.f32.mrb[0].mxu0
    %1417 = vdwg.mxu0
    %v1418 = vld [vmem:[%s5] sm:$0x1]
    %v1420 = vlaneseq
    %v1421 = vshrl.u32 %v1420, 7
    %v1422 = vsub.s32 0, %v1421
    %v1423 = vrot.slane %v1418, %v1422
    %v1425 = vadd.f32 %v1292, %v1423
    %v1426 = vadd.f32 %v1295, %v1423
    %v1427 = vadd.f32 %v1300, %v1423
    %v1428 = vadd.f32 %v1303, %v1423
    %v1429 = vadd.f32 %v1308, %v1423
    %v1430 = vadd.f32 %v1311, %v1423
    %v1431 = vadd.f32 %v1316, %v1423
    %v1432 = vadd.f32 %v1319, %v1423
    %v1433 = vadd.f32 %v1324, %v1423
    %v1434 = vadd.f32 %v1327, %v1423
    %v1435 = vadd.f32 %v1332, %v1423
    %v1436 = vadd.f32 %v1335, %v1423
    %v1437 = vadd.f32 %v1340, %v1423
    %v1438 = vadd.f32 %v1343, %v1423
    %v1439 = vadd.f32 %v1348, %v1423
    %v1440 = vadd.f32 %v1351, %v1423
    %v1441 = vadd.f32 %v1356, %v1423
    %v1442 = vadd.f32 %v1359, %v1423
    %v1443 = vadd.f32 %v1364, %v1423
    %v1444 = vadd.f32 %v1367, %v1423
    %v1445 = vadd.f32 %v1372, %v1423
    %v1446 = vadd.f32 %v1375, %v1423
    %v1447 = vadd.f32 %v1380, %v1423
    %v1448 = vadd.f32 %v1383, %v1423
    %v1449 = vadd.f32 %v1388, %v1423
    %v1450 = vadd.f32 %v1391, %v1423
    %v1451 = vadd.f32 %v1396, %v1423
    %v1452 = vadd.f32 %v1399, %v1423
    %v1453 = vadd.f32 %v1404, %v1423
    %v1454 = vadd.f32 %v1407, %v1423
    %v1455 = vadd.f32 %v1412, %v1423
    %v1456 = vadd.f32 %v1415, %v1423
    %v1457 = vsub.f32 0.0, %v1425
    %v1458 = vsub.f32 0.0, %v1426
    %v1459 = vsub.f32 0.0, %v1427
    %v1460 = vsub.f32 0.0, %v1428
    %v1461 = vsub.f32 0.0, %v1429
    %v1462 = vsub.f32 0.0, %v1430
    %v1463 = vsub.f32 0.0, %v1431
    %v1464 = vsub.f32 0.0, %v1432
    %v1465 = vsub.f32 0.0, %v1433
    %v1466 = vsub.f32 0.0, %v1434
    %v1467 = vsub.f32 0.0, %v1435
    %v1468 = vsub.f32 0.0, %v1436
    %v1469 = vsub.f32 0.0, %v1437
    %v1470 = vsub.f32 0.0, %v1438
    %v1471 = vsub.f32 0.0, %v1439
    %v1472 = vsub.f32 0.0, %v1440
    %v1473 = vsub.f32 0.0, %v1441
    %v1474 = vsub.f32 0.0, %v1442
    %v1475 = vsub.f32 0.0, %v1443
    %v1476 = vsub.f32 0.0, %v1444
    %v1477 = vsub.f32 0.0, %v1445
    %v1478 = vsub.f32 0.0, %v1446
    %v1479 = vsub.f32 0.0, %v1447
    %v1480 = vsub.f32 0.0, %v1448
    %v1481 = vsub.f32 0.0, %v1449
    %v1482 = vsub.f32 0.0, %v1450
    %v1483 = vsub.f32 0.0, %v1451
    %v1484 = vsub.f32 0.0, %v1452
    %v1485 = vsub.f32 0.0, %v1453
    %v1486 = vsub.f32 0.0, %v1454
    %v1487 = vsub.f32 0.0, %v1455
    %v1488 = vsub.f32 0.0, %v1456
    %v1489 = vmul.f32 %v1457, 1.442695
    %v1490 = vpow.pop %v1489
    %v1491 = vmul.f32 %v1458, 1.442695
    %v1492 = vpow.pop %v1491
    %v1493 = vmul.f32 %v1459, 1.442695
    %v1494 = vpow.pop %v1493
    %v1495 = vmul.f32 %v1460, 1.442695
    %v1496 = vpow.pop %v1495
    %v1497 = vmul.f32 %v1461, 1.442695
    %v1498 = vpow.pop %v1497
    %v1499 = vmul.f32 %v1462, 1.442695
    %v1500 = vpow.pop %v1499
    %v1501 = vmul.f32 %v1463, 1.442695
    %v1502 = vpow.pop %v1501
    %v1503 = vmul.f32 %v1464, 1.442695
    %v1504 = vpow.pop %v1503
    %v1505 = vmul.f32 %v1465, 1.442695
    %v1506 = vpow.pop %v1505
    %v1507 = vmul.f32 %v1466, 1.442695
    %v1508 = vpow.pop %v1507
    %v1509 = vmul.f32 %v1467, 1.442695
    %v1510 = vpow.pop %v1509
    %v1511 = vmul.f32 %v1468, 1.442695
    %v1512 = vpow.pop %v1511
    %v1513 = vmul.f32 %v1469, 1.442695
    %v1514 = vpow.pop %v1513
    %v1515 = vmul.f32 %v1470, 1.442695
    %v1516 = vpow.pop %v1515
    %v1517 = vmul.f32 %v1471, 1.442695
    %v1518 = vpow.pop %v1517
    %v1519 = vmul.f32 %v1472, 1.442695
    %v1520 = vpow.pop %v1519
    %v1521 = vmul.f32 %v1473, 1.442695
    %v1522 = vpow.pop %v1521
    %v1523 = vmul.f32 %v1474, 1.442695
    %v1524 = vpow.pop %v1523
    %v1525 = vmul.f32 %v1475, 1.442695
    %v1526 = vpow.pop %v1525
    %v1527 = vmul.f32 %v1476, 1.442695
    %v1528 = vpow.pop %v1527
    %v1529 = vmul.f32 %v1477, 1.442695
    %v1530 = vpow.pop %v1529
    %v1531 = vmul.f32 %v1478, 1.442695
    %v1532 = vpow.pop %v1531
    %v1533 = vmul.f32 %v1479, 1.442695
    %v1534 = vpow.pop %v1533
    %v1535 = vmul.f32 %v1480, 1.442695
    %v1536 = vpow.pop %v1535
    %v1537 = vmul.f32 %v1481, 1.442695
    %v1538 = vpow.pop %v1537
    %v1539 = vmul.f32 %v1482, 1.442695
    %v1540 = vpow.pop %v1539
    %v1541 = vmul.f32 %v1483, 1.442695
    %v1542 = vpow.pop %v1541
    %v1543 = vmul.f32 %v1484, 1.442695
    %v1544 = vpow.pop %v1543
    %v1545 = vmul.f32 %v1485, 1.442695
    %v1546 = vpow.pop %v1545
    %v1547 = vmul.f32 %v1486, 1.442695
    %v1548 = vpow.pop %v1547
    %v1549 = vmul.f32 %v1487, 1.442695
    %v1550 = vpow.pop %v1549
    %v1551 = vmul.f32 %v1488, 1.442695
    %v1552 = vpow.pop %v1551
    %v1553 = vadd.f32 %v1490, 1.0
    %v1554 = vadd.f32 %v1492, 1.0
    %v1555 = vadd.f32 %v1494, 1.0
    %v1556 = vadd.f32 %v1496, 1.0
    %v1557 = vadd.f32 %v1498, 1.0
    %v1558 = vadd.f32 %v1500, 1.0
    %v1559 = vadd.f32 %v1502, 1.0
    %v1560 = vadd.f32 %v1504, 1.0
    %v1561 = vadd.f32 %v1506, 1.0
    %v1562 = vadd.f32 %v1508, 1.0
    %v1563 = vadd.f32 %v1510, 1.0
    %v1564 = vadd.f32 %v1512, 1.0
    %v1565 = vadd.f32 %v1514, 1.0
    %v1566 = vadd.f32 %v1516, 1.0
    %v1567 = vadd.f32 %v1518, 1.0
    %v1568 = vadd.f32 %v1520, 1.0
    %v1569 = vadd.f32 %v1522, 1.0
    %v1570 = vadd.f32 %v1524, 1.0
    %v1571 = vadd.f32 %v1526, 1.0
    %v1572 = vadd.f32 %v1528, 1.0
    %v1573 = vadd.f32 %v1530, 1.0
    %v1574 = vadd.f32 %v1532, 1.0
    %v1575 = vadd.f32 %v1534, 1.0
    %v1576 = vadd.f32 %v1536, 1.0
    %v1577 = vadd.f32 %v1538, 1.0
    %v1578 = vadd.f32 %v1540, 1.0
    %v1579 = vadd.f32 %v1542, 1.0
    %v1580 = vadd.f32 %v1544, 1.0
    %v1581 = vadd.f32 %v1546, 1.0
    %v1582 = vadd.f32 %v1548, 1.0
    %v1583 = vadd.f32 %v1550, 1.0
    %v1584 = vadd.f32 %v1552, 1.0
    %v1585 = vrcp.pop %v1553
    %v1586 = vrcp.pop %v1554
    %v1587 = vrcp.pop %v1555
    %v1588 = vrcp.pop %v1556
    %v1589 = vrcp.pop %v1557
    %v1590 = vrcp.pop %v1558
    %v1591 = vrcp.pop %v1559
    %v1592 = vrcp.pop %v1560
    %v1593 = vrcp.pop %v1561
    %v1594 = vrcp.pop %v1562
    %v1595 = vrcp.pop %v1563
    %v1596 = vrcp.pop %v1564
    %v1597 = vrcp.pop %v1565
    %v1598 = vrcp.pop %v1566
    %v1599 = vrcp.pop %v1567
    %v1600 = vrcp.pop %v1568
    %v1601 = vrcp.pop %v1569
    %v1602 = vrcp.pop %v1570
    %v1603 = vrcp.pop %v1571
    %v1604 = vrcp.pop %v1572
    %v1605 = vrcp.pop %v1573
    %v1606 = vrcp.pop %v1574
    %v1607 = vrcp.pop %v1575
    %v1608 = vrcp.pop %v1576
    %v1609 = vrcp.pop %v1577
    %v1610 = vrcp.pop %v1578
    %v1611 = vrcp.pop %v1579
    %v1612 = vrcp.pop %v1580
    %v1613 = vrcp.pop %v1581
    %v1614 = vrcp.pop %v1582
    %v1615 = vrcp.pop %v1583
    %v1616 = vrcp.pop %v1584
    %vm1617 = vcmask 130048
    %1618 = vst.msk [vmem:[%s7] sm:$0xff] %vm1617, %v1585
    %1619 = vst.msk [vmem:[%s7 + $0x8] sm:$0xff] %vm1617, %v1586
    %1620 = vst.msk [vmem:[%s7 + $0x10] sm:$0xff] %vm1617, %v1587
    %1621 = vst.msk [vmem:[%s7 + $0x18] sm:$0xff] %vm1617, %v1588
    %1622 = vst.msk [vmem:[%s7 + $0x20] sm:$0xff] %vm1617, %v1589
    %1623 = vst.msk [vmem:[%s7 + $0x28] sm:$0xff] %vm1617, %v1590
    %1624 = vst.msk [vmem:[%s7 + $0x30] sm:$0xff] %vm1617, %v1591
    %1625 = vst.msk [vmem:[%s7 + $0x38] sm:$0xff] %vm1617, %v1592
    %1626 = vst.msk [vmem:[%s7 + $0x40] sm:$0xff] %vm1617, %v1593
    %1627 = vst.msk [vmem:[%s7 + $0x48] sm:$0xff] %vm1617, %v1594
    %1628 = vst.msk [vmem:[%s7 + $0x50] sm:$0xff] %vm1617, %v1595
    %1629 = vst.msk [vmem:[%s7 + $0x58] sm:$0xff] %vm1617, %v1596
    %1630 = vst.msk [vmem:[%s7 + $0x60] sm:$0xff] %vm1617, %v1597
    %1631 = vst.msk [vmem:[%s7 + $0x68] sm:$0xff] %vm1617, %v1598
    %1632 = vst.msk [vmem:[%s7 + $0x70] sm:$0xff] %vm1617, %v1599
    %1633 = vst.msk [vmem:[%s7 + $0x78] sm:$0xff] %vm1617, %v1600
    %1634 = vst.msk [vmem:[%s7 + $0x80] sm:$0xff] %vm1617, %v1601
    %1635 = vst.msk [vmem:[%s7 + $0x88] sm:$0xff] %vm1617, %v1602
    %1636 = vst.msk [vmem:[%s7 + $0x90] sm:$0xff] %vm1617, %v1603
    %1637 = vst.msk [vmem:[%s7 + $0x98] sm:$0xff] %vm1617, %v1604
    %1638 = vst.msk [vmem:[%s7 + $0xa0] sm:$0xff] %vm1617, %v1605
    %1639 = vst.msk [vmem:[%s7 + $0xa8] sm:$0xff] %vm1617, %v1606
    %1640 = vst.msk [vmem:[%s7 + $0xb0] sm:$0xff] %vm1617, %v1607
    %1641 = vst.msk [vmem:[%s7 + $0xb8] sm:$0xff] %vm1617, %v1608
    %1642 = vst.msk [vmem:[%s7 + $0xc0] sm:$0xff] %vm1617, %v1609
    %1643 = vst.msk [vmem:[%s7 + $0xc8] sm:$0xff] %vm1617, %v1610
    %1644 = vst.msk [vmem:[%s7 + $0xd0] sm:$0xff] %vm1617, %v1611
    %1645 = vst.msk [vmem:[%s7 + $0xd8] sm:$0xff] %vm1617, %v1612
    %1646 = vst.msk [vmem:[%s7 + $0xe0] sm:$0xff] %vm1617, %v1613
    %1647 = vst.msk [vmem:[%s7 + $0xe8] sm:$0xff] %vm1617, %v1614
    %1648 = vst.msk [vmem:[%s7 + $0xf0] sm:$0xff] %vm1617, %v1615
    %1649 = vst.msk [vmem:[%s7 + $0xf8] sm:$0xff] %vm1617, %v1616
    // Predicated region
    $region50: #{tpu_custom_call.1} parent=1 // pred_check
      _
    $region51: #{tpu_custom_call.1} parent=1 // pred_check_branch
      %1651 = sbr.rel (0) target = $region53
    $region52: #{tpu_custom_call.1} parent=1 // pred_region
      _
    $region53: #{tpu_custom_call.1} parent=1 // pred_fallthru
      _
    // Predicated region
    $region54: #{tpu_custom_call.1} parent=1 // pred_check
      _
    $region55: #{tpu_custom_call.1} parent=1 // pred_check_branch
      %1653 = sbr.rel (0) target = $region57
    $region56: #{tpu_custom_call.1} parent=1 // pred_region
      _
    $region57: #{tpu_custom_call.1} parent=1 // pred_fallthru
      _
    %1654 = vsyncpa [#allocation3], 1
    %1655 = vsyncpa [#allocation5], 1
    %1656 = vsyncpa [#allocation8], 1

</llo_original>
